<compile_context>
chip_gen: v7x
topology: tpu7x:2x2x1
jax: 0.10.0
libtpu: 0.0.40
codegen_flags: <defaults>
</compile_context>

<pallas_src>
import numpy as np

import jax
import jax.numpy as jnp
from jax import lax
from jax.experimental import pallas as pl
from jax.experimental.pallas import tpu as pltpu


# Fits v7x's 64 MiB/TC with headroom, well above v5e's 16 MiB scoped default.
_VMEM_LIMIT = 48 * 1024 * 1024

# Leading "parallel" grid axis for kernel 2: lets v7x shard the triangular
# schedule across its 2 TensorCores; on 1-TC chips it is just a sequential
# outer loop with negligible overhead.
_NUM_CORE_SPLITS = 2


def _round_up(a, b):
    return (a + b - 1) // b * b


# ----------------------------------------------------------------------------
# Kernel 1: fused per-row pass.
#   inputs : x_pad (n_pad, Dx), z_pad (n_pad, Dz), mean_x (1, Dx), mean_z (1, Dz)
#   outputs: XA/XB (n_pad, Dx+2), ZA/ZB (n_pad, Dz+2), d_x/d_z (n_pad, 1)
# ----------------------------------------------------------------------------
def _row_pass(x_pad, z_pad, mean_x, mean_z, tile_r):
    n_pad, dx = x_pad.shape
    _, dz = z_pad.shape
    dxa, dza = dx + 2, dz + 2
    nb = n_pad // tile_r

    def kernel(x_ref, z_ref, mx_ref, mz_ref,
               xa_ref, xb_ref, za_ref, zb_ref, dx_ref, dz_ref):
        x = x_ref[...]                                    # (tr, Dx)
        z = z_ref[...]                                    # (tr, Dz)
        mx = mx_ref[...]                                  # (1, Dx)
        mz = mz_ref[...]                                  # (1, Dz)

        sqx = jnp.sum(x * x, axis=1, keepdims=True)       # (tr, 1)
        sqz = jnp.sum(z * z, axis=1, keepdims=True)
        xm = jnp.sum(x * mx, axis=1, keepdims=True)
        zm = jnp.sum(z * mz, axis=1, keepdims=True)
        mx2 = jnp.sum(mx * mx)
        mz2 = jnp.sum(mz * mz)

        # ||x_i - m||^2 = |x_i|^2 - 2 x_i.m + |m|^2  (no transposed copies of x)
        dx_ref[...] = jnp.sqrt(jnp.maximum(sqx - 2.0 * xm + mx2, 0.0))
        dz_ref[...] = jnp.sqrt(jnp.maximum(sqz - 2.0 * zm + mz2, 0.0))

        ones_x = jnp.ones_like(sqx)
        ones_z = jnp.ones_like(sqz)
        # Augmented operands so kernel 2 gets squared distances off the MXU:
        #   A_i . B_j = |x_i|^2 + |x_j|^2 - 2 x_i.x_j = ||x_i - x_j||^2
        xa_ref[:, 0:dx] = x
        xa_ref[:, dx:dx + 1] = sqx
        xa_ref[:, dx + 1:dx + 2] = ones_x
        xb_ref[:, 0:dx] = -2.0 * x
        xb_ref[:, dx:dx + 1] = ones_x
        xb_ref[:, dx + 1:dx + 2] = sqx

        za_ref[:, 0:dz] = z
        za_ref[:, dz:dz + 1] = sqz
        za_ref[:, dz + 1:dz + 2] = ones_z
        zb_ref[:, 0:dz] = -2.0 * z
        zb_ref[:, dz:dz + 1] = ones_z
        zb_ref[:, dz + 1:dz + 2] = sqz

    out_shapes = (
        jax.ShapeDtypeStruct((n_pad, dxa), jnp.float32),
        jax.ShapeDtypeStruct((n_pad, dxa), jnp.float32),
        jax.ShapeDtypeStruct((n_pad, dza), jnp.float32),
        jax.ShapeDtypeStruct((n_pad, dza), jnp.float32),
        jax.ShapeDtypeStruct((n_pad, 1), jnp.float32),
        jax.ShapeDtypeStruct((n_pad, 1), jnp.float32),
    )
    out_specs = (
        pl.BlockSpec((tile_r, dxa), lambda i: (i, 0)),
        pl.BlockSpec((tile_r, dxa), lambda i: (i, 0)),
        pl.BlockSpec((tile_r, dza), lambda i: (i, 0)),
        pl.BlockSpec((tile_r, dza), lambda i: (i, 0)),
        pl.BlockSpec((tile_r, 1), lambda i: (i, 0)),
        pl.BlockSpec((tile_r, 1), lambda i: (i, 0)),
    )
    return pl.pallas_call(
        kernel,
        out_shape=out_shapes,
        grid=(nb,),
        in_specs=[
            pl.BlockSpec((tile_r, dx), lambda i: (i, 0)),
            pl.BlockSpec((tile_r, dz), lambda i: (i, 0)),
            pl.BlockSpec((1, dx), lambda i: (0, 0)),
            pl.BlockSpec((1, dz), lambda i: (0, 0)),
        ],
        out_specs=out_specs,
        compiler_params=pltpu.CompilerParams(
            dimension_semantics=("parallel",),
            vmem_limit_bytes=_VMEM_LIMIT),
    )(x_pad, z_pad, mean_x, mean_z)


# ----------------------------------------------------------------------------
# Kernel 2: block-triangular pairwise partial sums.
#   Returns (num_splits*8, tile_n) f32; rows 0/1/2 of each core's 8-row slab
#   hold lane-wide partial sums of [d_x^2, d_z^2, d_x*d_z] over the strict
#   upper triangle (valid rows/cols < n_valid only).
# ----------------------------------------------------------------------------
def _pairwise_partial_sums(xa, xb, za, zb, n_valid, tile_n):
    n_pad, dxa = xa.shape
    _, dza = za.shape
    nb = n_pad // tile_n
    tn = tile_n

    # Block-triangular schedule (cb >= rb), row-major so the row-role blocks
    # (xa/za) are revisited across each row sweep and not re-fetched.
    # flag: 0 = full block (no mask), 1 = diagonal/ragged (mask), 2 = skip pad.
    sched = []
    for rb in range(nb):
        for cb in range(rb, nb):
            col_full = (cb + 1) * tn <= n_valid
            flag = 0 if (cb > rb and col_full) else 1
            sched.append((rb, cb, flag))
    num_t = len(sched)
    spc = -(-num_t // _NUM_CORE_SPLITS)                       # steps per core
    sched += [(0, 0, 2)] * (spc * _NUM_CORE_SPLITS - num_t)   # pad with skips

    rows = jnp.asarray(np.array([s[0] for s in sched], dtype=np.int32))
    cols = jnp.asarray(np.array([s[1] for s in sched], dtype=np.int32))
    flags = jnp.asarray(np.array([s[2] for s in sched], dtype=np.int32))

    def kernel(rows_ref, cols_ref, flags_ref,
               xa_ref, xb_ref, za_ref, zb_ref, out_ref):
        c = pl.program_id(0)
        t = pl.program_id(1)
        idx = c * spc + t

        @pl.when(t == 0)
        def _init():
            out_ref[...] = jnp.zeros_like(out_ref)

        # Squared pairwise distances straight off the MXU (augmented operands).
        d2x = jnp.maximum(
            lax.dot_general(xa_ref[...], xb_ref[...],
                            (((1,), (1,)), ((), ())),
                            preferred_element_type=jnp.float32), 0.0)
        d2z = jnp.maximum(
            lax.dot_general(za_ref[...], zb_ref[...],
                            (((1,), (1,)), ((), ())),
                            preferred_element_type=jnp.float32), 0.0)

        flag = flags_ref[idx]

        @pl.when(flag == 0)
        def _full():
            # strictly-above-diagonal, fully-valid block: no mask needed.
            dxz = jnp.sqrt(d2x * d2z)           # single sqrt map: d_x * d_z
            out_ref[0:1, :] += jnp.sum(d2x, axis=0, keepdims=True)
            out_ref[1:2, :] += jnp.sum(d2z, axis=0, keepdims=True)
            out_ref[2:3, :] += jnp.sum(dxz, axis=0, keepdims=True)

        @pl.when(flag == 1)
        def _masked():
            rb = rows_ref[idx]
            cb = cols_ref[idx]
            grow = rb * tn + lax.broadcasted_iota(jnp.int32, (tn, tn), 0)
            gcol = cb * tn + lax.broadcasted_iota(jnp.int32, (tn, tn), 1)
            m = jnp.logical_and(gcol > grow, gcol < n_valid)
            d2xm = jnp.where(m, d2x, 0.0)
            d2zm = jnp.where(m, d2z, 0.0)
            dxzm = jnp.sqrt(d2xm * d2zm)        # zeros propagate via the product
            out_ref[0:1, :] += jnp.sum(d2xm, axis=0, keepdims=True)
            out_ref[1:2, :] += jnp.sum(d2zm, axis=0, keepdims=True)
            out_ref[2:3, :] += jnp.sum(dxzm, axis=0, keepdims=True)

    grid_spec = pltpu.PrefetchScalarGridSpec(
        num_scalar_prefetch=3,
        grid=(_NUM_CORE_SPLITS, spc),
        in_specs=[
            pl.BlockSpec((tn, dxa), lambda c, t, r, co, f: (r[c * spc + t], 0)),
            pl.BlockSpec((tn, dxa), lambda c, t, r, co, f: (co[c * spc + t], 0)),
            pl.BlockSpec((tn, dza), lambda c, t, r, co, f: (r[c * spc + t], 0)),
            pl.BlockSpec((tn, dza), lambda c, t, r, co, f: (co[c * spc + t], 0)),
        ],
        out_specs=pl.BlockSpec((8, tn), lambda c, t, r, co, f: (c, 0)),
    )

    return pl.pallas_call(
        kernel,
        out_shape=jax.ShapeDtypeStruct((_NUM_CORE_SPLITS * 8, tn), jnp.float32),
        grid_spec=grid_spec,
        compiler_params=pltpu.CompilerParams(
            dimension_semantics=("parallel", "arbitrary"),
            vmem_limit_bytes=_VMEM_LIMIT),
    )(rows, cols, flags, xa, xb, za, zb)


# ----------------------------------------------------------------------------
# Full forward (mode='raw'), matching NSALoss_adapted.forward semantics.
# ----------------------------------------------------------------------------
def nsa_loss_adapted(x, z, origin_x, origin_z, q=0.98, tile_n=None):
    x = x.astype(jnp.float32)
    z = z.astype(jnp.float32)
    origin_x = origin_x.astype(jnp.float32)
    origin_z = origin_z.astype(jnp.float32)

    n, dx = x.shape
    _, dz = z.shape
    if tile_n is None:
        # Big tiles amortize the ~0.35us per-grid-step overhead; cap padding
        # waste for small N.  Always a multiple of 128, 512 once N >= 512.
        tile_n = min(512, _round_up(n, 128))
    n_pad = _round_up(n, tile_n)

    mean_x = jnp.mean(origin_x, axis=0).reshape(1, dx)    # (1, Dx)
    mean_z = jnp.mean(origin_z, axis=0).reshape(1, dz)    # (1, Dz)

    x_pad = jnp.pad(x, ((0, n_pad - n), (0, 0)))
    z_pad = jnp.pad(z, ((0, n_pad - n), (0, 0)))

    # Kernel 1: distances to mean (for the quantiles) + augmented operands.
    xa, xb, za, zb, d_x, d_z = _row_pass(x_pad, z_pad, mean_x, mean_z, tile_n)

    # TODO(synk): quantile (sort) stays in plain JAX; torch default 'linear'
    # interpolation == jnp.quantile default.
    normA1 = jnp.quantile(d_x[:n, 0], q)
    normA2 = jnp.quantile(d_z[:n, 0], q)

    # Kernel 2: pairwise partial sums (independent of the quantile).
    sums = _pairwise_partial_sums(xa, xb, za, zb, n, tile_n)
    sums = sums.reshape(_NUM_CORE_SPLITS, 8, tile_n)
    s11 = jnp.sum(sums[:, 0, :])
    s22 = jnp.sum(sums[:, 1, :])
    s12 = jnp.sum(sums[:, 2, :])

    inv1 = 1.0 / (2.0 * normA1)
    inv2 = 1.0 / (2.0 * normA2)
    count = n * (n - 1) / 2.0
    return (inv1 * inv1 * s11 + inv2 * inv2 * s22
            - 2.0 * inv1 * inv2 * s12) / count


# ----------------------------------------------------------------------------
# Pure-JAX reference (mirrors the PyTorch code) for a correctness check.
# ----------------------------------------------------------------------------
def nsa_loss_reference(x, z, origin_x, origin_z, q=0.98):
    mean_x = jnp.mean(origin_x, axis=0)
    mean_z = jnp.mean(origin_z, axis=0)
    normA1 = jnp.quantile(jnp.sqrt(jnp.sum((x - mean_x) ** 2, axis=1)), q)
    normA2 = jnp.quantile(jnp.sqrt(jnp.sum((z - mean_z) ** 2, axis=1)), q)
    A1 = jnp.sqrt(jnp.sum((x[:, None, :] - x[None, :, :]) ** 2, axis=-1))
    A2 = jnp.sqrt(jnp.sum((z[:, None, :] - z[None, :, :]) ** 2, axis=-1))
    n = x.shape[0]
    row = jnp.arange(n)[:, None]
    col = jnp.arange(n)[None, :]
    mask = col > row
    a1 = A1[mask] / (2.0 * normA1)
    a2 = A2[mask] / (2.0 * normA2)
    return jnp.mean(jnp.square(a2 - a1))


if __name__ == "__main__":
    key = jax.random.PRNGKey(0)
    k1, k2, k3, k4 = jax.random.split(key, 4)

    N, M, Dx, Dz = 8, 16, 32, 16
    x = jax.random.normal(k1, (N, Dx), dtype=jnp.float32)
    z = jax.random.normal(k2, (N, Dz), dtype=jnp.float32)
    origin_x = jax.random.normal(k3, (M, Dx), dtype=jnp.float32)
    origin_z = jax.random.normal(k4, (M, Dz), dtype=jnp.float32)

    loss = jax.jit(nsa_loss_adapted)(x, z, origin_x, origin_z)
    loss = jax.block_until_ready(loss)

    ref = jax.block_until_ready(nsa_loss_reference(x, z, origin_x, origin_z))
    np.testing.assert_allclose(np.asarray(loss), np.asarray(ref),
                               rtol=2e-3, atol=1e-5)

    print("KERNEL_OK")
</pallas_src>

<mosaic_0001>
module attributes {stable_mosaic.version = 11 : i64} {
  func.func @kernel(%arg0: i32, %arg1: memref<128x32xf32, #tpu.memory_space<vmem>>, %arg2: memref<128x16xf32, #tpu.memory_space<vmem>>, %arg3: memref<1x32xf32, #tpu.memory_space<vmem>>, %arg4: memref<1x16xf32, #tpu.memory_space<vmem>>, %arg5: memref<128x34xf32, #tpu.memory_space<vmem>>, %arg6: memref<128x34xf32, #tpu.memory_space<vmem>>, %arg7: memref<128x18xf32, #tpu.memory_space<vmem>>, %arg8: memref<128x18xf32, #tpu.memory_space<vmem>>, %arg9: memref<128x1xf32, #tpu.memory_space<vmem>>, %arg10: memref<128x1xf32, #tpu.memory_space<vmem>>) attributes {dimension_semantics = [#tpu.dimension_semantics<parallel>], iteration_bounds = array<i64: 1>, scalar_prefetch = 0 : i64, scratch_operands = 0 : i64, tpu.core_type = #tpu.core_type<tc>, window_params = [{transform_indices = @transform_0, window_bounds = array<i64: 128, 32>}, {transform_indices = @transform_1, window_bounds = array<i64: 128, 16>}, {pipeline_mode = #tpu.pipeline_mode<synchronous>, transform_indices = @transform_2, window_bounds = array<i64: 1, 32>}, {pipeline_mode = #tpu.pipeline_mode<synchronous>, transform_indices = @transform_3, window_bounds = array<i64: 1, 16>}, {transform_indices = @transform_4, window_bounds = array<i64: 128, 34>}, {transform_indices = @transform_5, window_bounds = array<i64: 128, 34>}, {transform_indices = @transform_6, window_bounds = array<i64: 128, 18>}, {transform_indices = @transform_7, window_bounds = array<i64: 128, 18>}, {transform_indices = @transform_8, window_bounds = array<i64: 128, 1>}, {transform_indices = @transform_9, window_bounds = array<i64: 128, 1>}]} {
    %c0 = arith.constant 0 : index
    %c0_0 = arith.constant 0 : index
    %0 = vector.load %arg1[%c0, %c0_0] : memref<128x32xf32, #tpu.memory_space<vmem>>, vector<128x32xf32>
    %c0_1 = arith.constant 0 : index
    %c0_2 = arith.constant 0 : index
    %1 = vector.load %arg2[%c0_1, %c0_2] : memref<128x16xf32, #tpu.memory_space<vmem>>, vector<128x16xf32>
    %c0_3 = arith.constant 0 : index
    %c0_4 = arith.constant 0 : index
    %2 = vector.load %arg3[%c0_3, %c0_4] : memref<1x32xf32, #tpu.memory_space<vmem>>, vector<1x32xf32>
    %c0_5 = arith.constant 0 : index
    %c0_6 = arith.constant 0 : index
    %3 = vector.load %arg4[%c0_5, %c0_6] : memref<1x16xf32, #tpu.memory_space<vmem>>, vector<1x16xf32>
    %4 = arith.mulf %0, %0 : vector<128x32xf32>
    %cst = arith.constant dense<0.000000e+00> : vector<128xf32>
    %5 = vector.multi_reduction <add>, %4, %cst [1] : vector<128x32xf32> to vector<128xf32>
    %6 = vector.shape_cast %5 : vector<128xf32> to vector<128x1xf32>
    %7 = arith.mulf %1, %1 : vector<128x16xf32>
    %cst_7 = arith.constant dense<0.000000e+00> : vector<128xf32>
    %8 = vector.multi_reduction <add>, %7, %cst_7 [1] : vector<128x16xf32> to vector<128xf32>
    %9 = vector.shape_cast %8 : vector<128xf32> to vector<128x1xf32>
    %10 = vector.broadcast %2 : vector<1x32xf32> to vector<128x32xf32>
    %11 = arith.mulf %0, %10 : vector<128x32xf32>
    %cst_8 = arith.constant dense<0.000000e+00> : vector<128xf32>
    %12 = vector.multi_reduction <add>, %11, %cst_8 [1] : vector<128x32xf32> to vector<128xf32>
    %13 = vector.shape_cast %12 : vector<128xf32> to vector<128x1xf32>
    %14 = vector.broadcast %3 : vector<1x16xf32> to vector<128x16xf32>
    %15 = arith.mulf %1, %14 : vector<128x16xf32>
    %cst_9 = arith.constant dense<0.000000e+00> : vector<128xf32>
    %16 = vector.multi_reduction <add>, %15, %cst_9 [1] : vector<128x16xf32> to vector<128xf32>
    %17 = vector.shape_cast %16 : vector<128xf32> to vector<128x1xf32>
    %18 = arith.mulf %2, %2 : vector<1x32xf32>
    %19 = vector.shape_cast %18 : vector<1x32xf32> to vector<1x1x32xf32>
    %cst_10 = arith.constant dense<0.000000e+00> : vector<1xf32>
    %20 = vector.multi_reduction <add>, %19, %cst_10 [1, 2] : vector<1x1x32xf32> to vector<1xf32>
    %21 = vector.shape_cast %20 : vector<1xf32> to vector<1x1x1xf32>
    %22 = vector.extract %21[0, 0, 0] : f32 from vector<1x1x1xf32>
    %23 = arith.mulf %3, %3 : vector<1x16xf32>
    %24 = vector.shape_cast %23 : vector<1x16xf32> to vector<1x1x16xf32>
    %cst_11 = arith.constant dense<0.000000e+00> : vector<1xf32>
    %25 = vector.multi_reduction <add>, %24, %cst_11 [1, 2] : vector<1x1x16xf32> to vector<1xf32>
    %26 = vector.shape_cast %25 : vector<1xf32> to vector<1x1x1xf32>
    %27 = vector.extract %26[0, 0, 0] : f32 from vector<1x1x1xf32>
    %cst_12 = arith.constant 2.000000e+00 : f32
    %28 = vector.broadcast %cst_12 : f32 to vector<128x1xf32>
    %29 = arith.mulf %28, %13 : vector<128x1xf32>
    %30 = arith.subf %6, %29 : vector<128x1xf32>
    %31 = vector.broadcast %22 : f32 to vector<128x1xf32>
    %32 = arith.addf %30, %31 : vector<128x1xf32>
    %cst_13 = arith.constant 0.000000e+00 : f32
    %33 = vector.broadcast %cst_13 : f32 to vector<128x1xf32>
    %34 = arith.maximumf %32, %33 : vector<128x1xf32>
    %35 = math.sqrt %34 : vector<128x1xf32>
    %c0_14 = arith.constant 0 : index
    %c0_15 = arith.constant 0 : index
    %36 = vector.load %arg9[%c0_14, %c0_15] : memref<128x1xf32, #tpu.memory_space<vmem>>, vector<128x1xf32>
    tpu.vector_store %arg9[%c0_14, %c0_15], %35 {strides = array<i32>} : memref<128x1xf32, #tpu.memory_space<vmem>>, vector<128x1xf32>,
    %cst_16 = arith.constant 2.000000e+00 : f32
    %37 = vector.broadcast %cst_16 : f32 to vector<128x1xf32>
    %38 = arith.mulf %37, %17 : vector<128x1xf32>
    %39 = arith.subf %9, %38 : vector<128x1xf32>
    %40 = vector.broadcast %27 : f32 to vector<128x1xf32>
    %41 = arith.addf %39, %40 : vector<128x1xf32>
    %cst_17 = arith.constant 0.000000e+00 : f32
    %42 = vector.broadcast %cst_17 : f32 to vector<128x1xf32>
    %43 = arith.maximumf %41, %42 : vector<128x1xf32>
    %44 = math.sqrt %43 : vector<128x1xf32>
    %c0_18 = arith.constant 0 : index
    %c0_19 = arith.constant 0 : index
    %45 = vector.load %arg10[%c0_18, %c0_19] : memref<128x1xf32, #tpu.memory_space<vmem>>, vector<128x1xf32>
    tpu.vector_store %arg10[%c0_18, %c0_19], %44 {strides = array<i32>} : memref<128x1xf32, #tpu.memory_space<vmem>>, vector<128x1xf32>,
    %cst_20 = arith.constant 1.000000e+00 : f32
    %46 = vector.broadcast %cst_20 : f32 to vector<128x1xf32>
    %cst_21 = arith.constant 1.000000e+00 : f32
    %47 = vector.broadcast %cst_21 : f32 to vector<128x1xf32>
    %c0_22 = arith.constant 0 : index
    %c0_23 = arith.constant 0 : index
    %48 = vector.load %arg5[%c0_22, %c0_23] : memref<128x34xf32, #tpu.memory_space<vmem>>, vector<128x32xf32>
    tpu.vector_store %arg5[%c0_22, %c0_23], %0 {strides = array<i32>} : memref<128x34xf32, #tpu.memory_space<vmem>>, vector<128x32xf32>,
    %c0_24 = arith.constant 0 : index
    %c32 = arith.constant 32 : index
    %49 = vector.load %arg5[%c0_24, %c32] : memref<128x34xf32, #tpu.memory_space<vmem>>, vector<128x1xf32>
    tpu.vector_store %arg5[%c0_24, %c32], %6 {strides = array<i32>} : memref<128x34xf32, #tpu.memory_space<vmem>>, vector<128x1xf32>,
    %c0_25 = arith.constant 0 : index
    %c33 = arith.constant 33 : index
    %50 = vector.load %arg5[%c0_25, %c33] : memref<128x34xf32, #tpu.memory_space<vmem>>, vector<128x1xf32>
    tpu.vector_store %arg5[%c0_25, %c33], %46 {strides = array<i32>} : memref<128x34xf32, #tpu.memory_space<vmem>>, vector<128x1xf32>,
    %cst_26 = arith.constant -2.000000e+00 : f32
    %51 = vector.broadcast %cst_26 : f32 to vector<128x32xf32>
    %52 = arith.mulf %51, %0 : vector<128x32xf32>
    %c0_27 = arith.constant 0 : index
    %c0_28 = arith.constant 0 : index
    %53 = vector.load %arg6[%c0_27, %c0_28] : memref<128x34xf32, #tpu.memory_space<vmem>>, vector<128x32xf32>
    tpu.vector_store %arg6[%c0_27, %c0_28], %52 {strides = array<i32>} : memref<128x34xf32, #tpu.memory_space<vmem>>, vector<128x32xf32>,
    %c0_29 = arith.constant 0 : index
    %c32_30 = arith.constant 32 : index
    %54 = vector.load %arg6[%c0_29, %c32_30] : memref<128x34xf32, #tpu.memory_space<vmem>>, vector<128x1xf32>
    tpu.vector_store %arg6[%c0_29, %c32_30], %46 {strides = array<i32>} : memref<128x34xf32, #tpu.memory_space<vmem>>, vector<128x1xf32>,
    %c0_31 = arith.constant 0 : index
    %c33_32 = arith.constant 33 : index
    %55 = vector.load %arg6[%c0_31, %c33_32] : memref<128x34xf32, #tpu.memory_space<vmem>>, vector<128x1xf32>
    tpu.vector_store %arg6[%c0_31, %c33_32], %6 {strides = array<i32>} : memref<128x34xf32, #tpu.memory_space<vmem>>, vector<128x1xf32>,
    %c0_33 = arith.constant 0 : index
    %c0_34 = arith.constant 0 : index
    %56 = vector.load %arg7[%c0_33, %c0_34] : memref<128x18xf32, #tpu.memory_space<vmem>>, vector<128x16xf32>
    tpu.vector_store %arg7[%c0_33, %c0_34], %1 {strides = array<i32>} : memref<128x18xf32, #tpu.memory_space<vmem>>, vector<128x16xf32>,
    %c0_35 = arith.constant 0 : index
    %c16 = arith.constant 16 : index
    %57 = vector.load %arg7[%c0_35, %c16] : memref<128x18xf32, #tpu.memory_space<vmem>>, vector<128x1xf32>
    tpu.vector_store %arg7[%c0_35, %c16], %9 {strides = array<i32>} : memref<128x18xf32, #tpu.memory_space<vmem>>, vector<128x1xf32>,
    %c0_36 = arith.constant 0 : index
    %c17 = arith.constant 17 : index
    %58 = vector.load %arg7[%c0_36, %c17] : memref<128x18xf32, #tpu.memory_space<vmem>>, vector<128x1xf32>
    tpu.vector_store %arg7[%c0_36, %c17], %47 {strides = array<i32>} : memref<128x18xf32, #tpu.memory_space<vmem>>, vector<128x1xf32>,
    %cst_37 = arith.constant -2.000000e+00 : f32
    %59 = vector.broadcast %cst_37 : f32 to vector<128x16xf32>
    %60 = arith.mulf %59, %1 : vector<128x16xf32>
    %c0_38 = arith.constant 0 : index
    %c0_39 = arith.constant 0 : index
    %61 = vector.load %arg8[%c0_38, %c0_39] : memref<128x18xf32, #tpu.memory_space<vmem>>, vector<128x16xf32>
    tpu.vector_store %arg8[%c0_38, %c0_39], %60 {strides = array<i32>} : memref<128x18xf32, #tpu.memory_space<vmem>>, vector<128x16xf32>,
    %c0_40 = arith.constant 0 : index
    %c16_41 = arith.constant 16 : index
    %62 = vector.load %arg8[%c0_40, %c16_41] : memref<128x18xf32, #tpu.memory_space<vmem>>, vector<128x1xf32>
    tpu.vector_store %arg8[%c0_40, %c16_41], %47 {strides = array<i32>} : memref<128x18xf32, #tpu.memory_space<vmem>>, vector<128x1xf32>,
    %c0_42 = arith.constant 0 : index
    %c17_43 = arith.constant 17 : index
    %63 = vector.load %arg8[%c0_42, %c17_43] : memref<128x18xf32, #tpu.memory_space<vmem>>, vector<128x1xf32>
    tpu.vector_store %arg8[%c0_42, %c17_43], %9 {strides = array<i32>} : memref<128x18xf32, #tpu.memory_space<vmem>>, vector<128x1xf32>,
    return
  }
  func.func @transform_0(%arg0: i32) -> (i32, i32) {
    %c0_i32 = arith.constant 0 : i32
    %c0_i32_0 = arith.constant 0 : i32
    return %arg0, %c0_i32 : i32, i32
  }
  func.func @transform_1(%arg0: i32) -> (i32, i32) {
    %c0_i32 = arith.constant 0 : i32
    %c0_i32_0 = arith.constant 0 : i32
    return %arg0, %c0_i32 : i32, i32
  }
  func.func @transform_2(%arg0: i32) -> (i32, i32) {
    %c0_i32 = arith.constant 0 : i32
    %c0_i32_0 = arith.constant 0 : i32
    %c0_i32_1 = arith.constant 0 : i32
    return %c0_i32, %c0_i32_0 : i32, i32
  }
  func.func @transform_3(%arg0: i32) -> (i32, i32) {
    %c0_i32 = arith.constant 0 : i32
    %c0_i32_0 = arith.constant 0 : i32
    %c0_i32_1 = arith.constant 0 : i32
    return %c0_i32, %c0_i32_0 : i32, i32
  }
  func.func @transform_4(%arg0: i32) -> (i32, i32) {
    %c0_i32 = arith.constant 0 : i32
    %c0_i32_0 = arith.constant 0 : i32
    return %arg0, %c0_i32 : i32, i32
  }
  func.func @transform_5(%arg0: i32) -> (i32, i32) {
    %c0_i32 = arith.constant 0 : i32
    %c0_i32_0 = arith.constant 0 : i32
    return %arg0, %c0_i32 : i32, i32
  }
  func.func @transform_6(%arg0: i32) -> (i32, i32) {
    %c0_i32 = arith.constant 0 : i32
    %c0_i32_0 = arith.constant 0 : i32
    return %arg0, %c0_i32 : i32, i32
  }
  func.func @transform_7(%arg0: i32) -> (i32, i32) {
    %c0_i32 = arith.constant 0 : i32
    %c0_i32_0 = arith.constant 0 : i32
    return %arg0, %c0_i32 : i32, i32
  }
  func.func @transform_8(%arg0: i32) -> (i32, i32) {
    %c0_i32 = arith.constant 0 : i32
    %c0_i32_0 = arith.constant 0 : i32
    return %arg0, %c0_i32 : i32, i32
  }
  func.func @transform_9(%arg0: i32) -> (i32, i32) {
    %c0_i32 = arith.constant 0 : i32
    %c0_i32_0 = arith.constant 0 : i32
    return %arg0, %c0_i32 : i32, i32
  }
}

module attributes {stable_mosaic.version = 11 : i64} {
  func.func @kernel(%arg0: i32, %arg1: i32, %arg2: memref<2xi32, #tpu.memory_space<smem>>, %arg3: memref<2xi32, #tpu.memory_space<smem>>, %arg4: memref<2xi32, #tpu.memory_space<smem>>, %arg5: memref<128x34xf32, #tpu.memory_space<vmem>>, %arg6: memref<128x34xf32, #tpu.memory_space<vmem>>, %arg7: memref<128x18xf32, #tpu.memory_space<vmem>>, %arg8: memref<128x18xf32, #tpu.memory_space<vmem>>, %arg9: memref<8x128xf32, #tpu.memory_space<vmem>>) attributes {dimension_semantics = [#tpu.dimension_semantics<parallel>, #tpu.dimension_semantics<arbitrary>], iteration_bounds = array<i64: 2, 1>, scalar_prefetch = 3 : i64, scratch_operands = 0 : i64, tpu.core_type = #tpu.core_type<tc>, window_params = [{transform_indices = @transform_0, window_bounds = array<i64: 128, 34>}, {transform_indices = @transform_1, window_bounds = array<i64: 128, 34>}, {transform_indices = @transform_2, window_bounds = array<i64: 128, 18>}, {transform_indices = @transform_3, window_bounds = array<i64: 128, 18>}, {transform_indices = @transform_4, window_bounds = array<i64: 8, 128>}]} {
    %c1_i32 = arith.constant 1 : i32
    %0 = arith.muli %arg0, %c1_i32 : i32
    %1 = arith.addi %0, %arg1 : i32
    %c0_i32 = arith.constant 0 : i32
    %2 = arith.cmpi eq, %arg1, %c0_i32 : i32
    %3 = arith.extui %2 : i1 to i32
    %c0_i32_0 = arith.constant 0 : i32
    %4 = arith.cmpi ne, %3, %c0_i32_0 : i32
    scf.if %4 {
      %cst_15 = arith.constant 0.000000e+00 : f32
      %23 = vector.broadcast %cst_15 : f32 to vector<8x128xf32>
      %c0_16 = arith.constant 0 : index
      %c0_17 = arith.constant 0 : index
      %24 = vector.load %arg9[%c0_16, %c0_17] : memref<8x128xf32, #tpu.memory_space<vmem>>, vector<8x128xf32>
      tpu.vector_store %arg9[%c0_16, %c0_17], %23 {strides = array<i32>} : memref<8x128xf32, #tpu.memory_space<vmem>>, vector<8x128xf32>,
    } else {
    }
    %c0 = arith.constant 0 : index
    %c0_1 = arith.constant 0 : index
    %5 = vector.load %arg5[%c0, %c0_1] : memref<128x34xf32, #tpu.memory_space<vmem>>, vector<128x34xf32>
    %c0_2 = arith.constant 0 : index
    %c0_3 = arith.constant 0 : index
    %6 = vector.load %arg6[%c0_2, %c0_3] : memref<128x34xf32, #tpu.memory_space<vmem>>, vector<128x34xf32>
    %cst = arith.constant dense<0.000000e+00> : vector<128x128xf32>
    %7 = tpu.matmul %5, %6, %cst {dimension_numbers = #tpu.dot_dimension_numbers<[1], [1], [0], [0], [0, 0, 1, 0], [], []>} : vector<128x34xf32>, vector<128x34xf32>, vector<128x128xf32> -> vector<128x128xf32>
    %cst_4 = arith.constant 0.000000e+00 : f32
    %8 = vector.broadcast %cst_4 : f32 to vector<128x128xf32>
    %9 = arith.maximumf %7, %8 : vector<128x128xf32>
    %c0_5 = arith.constant 0 : index
    %c0_6 = arith.constant 0 : index
    %10 = vector.load %arg7[%c0_5, %c0_6] : memref<128x18xf32, #tpu.memory_space<vmem>>, vector<128x18xf32>
    %c0_7 = arith.constant 0 : index
    %c0_8 = arith.constant 0 : index
    %11 = vector.load %arg8[%c0_7, %c0_8] : memref<128x18xf32, #tpu.memory_space<vmem>>, vector<128x18xf32>
    %cst_9 = arith.constant dense<0.000000e+00> : vector<128x128xf32>
    %12 = tpu.matmul %10, %11, %cst_9 {dimension_numbers = #tpu.dot_dimension_numbers<[1], [1], [0], [0], [0, 0, 1, 0], [], []>} : vector<128x18xf32>, vector<128x18xf32>, vector<128x128xf32> -> vector<128x128xf32>
    %cst_10 = arith.constant 0.000000e+00 : f32
    %13 = vector.broadcast %cst_10 : f32 to vector<128x128xf32>
    %14 = arith.maximumf %12, %13 : vector<128x128xf32>
    %15 = arith.index_cast %1 : i32 to index
    %16 = memref.load %arg4[%15] : memref<2xi32, #tpu.memory_space<smem>>
    %c0_i32_11 = arith.constant 0 : i32
    %17 = arith.cmpi eq, %16, %c0_i32_11 : i32
    %18 = arith.extui %17 : i1 to i32
    %c0_i32_12 = arith.constant 0 : i32
    %19 = arith.cmpi ne, %18, %c0_i32_12 : i32
    scf.if %19 {
      %23 = arith.mulf %9, %14 : vector<128x128xf32>
      %24 = math.sqrt %23 : vector<128x128xf32>
      %c0_15 = arith.constant 0 : index
      %c0_16 = arith.constant 0 : index
      %25 = vector.load %arg9[%c0_15, %c0_16] : memref<8x128xf32, #tpu.memory_space<vmem>>, vector<1x128xf32>
      %cst_17 = arith.constant dense<0.000000e+00> : vector<128xf32>
      %26 = vector.multi_reduction <add>, %9, %cst_17 [0] : vector<128x128xf32> to vector<128xf32>
      %27 = vector.shape_cast %26 : vector<128xf32> to vector<1x128xf32>
      %28 = arith.addf %25, %27 : vector<1x128xf32>
      %c0_18 = arith.constant 0 : index
      %c0_19 = arith.constant 0 : index
      %29 = vector.load %arg9[%c0_18, %c0_19] : memref<8x128xf32, #tpu.memory_space<vmem>>, vector<1x128xf32>
      tpu.vector_store %arg9[%c0_18, %c0_19], %28 {strides = array<i32>} : memref<8x128xf32, #tpu.memory_space<vmem>>, vector<1x128xf32>,
      %c1 = arith.constant 1 : index
      %c0_20 = arith.constant 0 : index
      %30 = vector.load %arg9[%c1, %c0_20] : memref<8x128xf32, #tpu.memory_space<vmem>>, vector<1x128xf32>
      %cst_21 = arith.constant dense<0.000000e+00> : vector<128xf32>
      %31 = vector.multi_reduction <add>, %14, %cst_21 [0] : vector<128x128xf32> to vector<128xf32>
      %32 = vector.shape_cast %31 : vector<128xf32> to vector<1x128xf32>
      %33 = arith.addf %30, %32 : vector<1x128xf32>
      %c1_22 = arith.constant 1 : index
      %c0_23 = arith.constant 0 : index
      %34 = vector.load %arg9[%c1_22, %c0_23] : memref<8x128xf32, #tpu.memory_space<vmem>>, vector<1x128xf32>
      tpu.vector_store %arg9[%c1_22, %c0_23], %33 {strides = array<i32>} : memref<8x128xf32, #tpu.memory_space<vmem>>, vector<1x128xf32>,
      %c2 = arith.constant 2 : index
      %c0_24 = arith.constant 0 : index
      %35 = vector.load %arg9[%c2, %c0_24] : memref<8x128xf32, #tpu.memory_space<vmem>>, vector<1x128xf32>
      %cst_25 = arith.constant dense<0.000000e+00> : vector<128xf32>
      %36 = vector.multi_reduction <add>, %24, %cst_25 [0] : vector<128x128xf32> to vector<128xf32>
      %37 = vector.shape_cast %36 : vector<128xf32> to vector<1x128xf32>
      %38 = arith.addf %35, %37 : vector<1x128xf32>
      %c2_26 = arith.constant 2 : index
      %c0_27 = arith.constant 0 : index
      %39 = vector.load %arg9[%c2_26, %c0_27] : memref<8x128xf32, #tpu.memory_space<vmem>>, vector<1x128xf32>
      tpu.vector_store %arg9[%c2_26, %c0_27], %38 {strides = array<i32>} : memref<8x128xf32, #tpu.memory_space<vmem>>, vector<1x128xf32>,
    } else {
    }
    %c1_i32_13 = arith.constant 1 : i32
    %20 = arith.cmpi eq, %16, %c1_i32_13 : i32
    %21 = arith.extui %20 : i1 to i32
    %c0_i32_14 = arith.constant 0 : i32
    %22 = arith.cmpi ne, %21, %c0_i32_14 : i32
    scf.if %22 {
      %23 = arith.index_cast %1 : i32 to index
      %24 = memref.load %arg2[%23] : memref<2xi32, #tpu.memory_space<smem>>
      %25 = arith.index_cast %1 : i32 to index
      %26 = memref.load %arg3[%25] : memref<2xi32, #tpu.memory_space<smem>>
      %c128_i32 = arith.constant 128 : i32
      %27 = arith.muli %24, %c128_i32 : i32
      %28 = tpu.iota {dimensions = array<i32: 0>} : vector<128x128xi32>
      %29 = vector.broadcast %27 : i32 to vector<128x128xi32>
      %30 = arith.addi %29, %28 : vector<128x128xi32>
      %c128_i32_15 = arith.constant 128 : i32
      %31 = arith.muli %26, %c128_i32_15 : i32
      %32 = tpu.iota {dimensions = array<i32: 1>} : vector<128x128xi32>
      %33 = vector.broadcast %31 : i32 to vector<128x128xi32>
      %34 = arith.addi %33, %32 : vector<128x128xi32>
      %35 = arith.cmpi sgt, %34, %30 : vector<128x128xi32>
      %c8_i32 = arith.constant 8 : i32
      %36 = vector.broadcast %c8_i32 : i32 to vector<128x128xi32>
      %37 = arith.cmpi slt, %34, %36 : vector<128x128xi32>
      %38 = arith.andi %35, %37 : vector<128x128xi1>
      %cst_16 = arith.constant 0.000000e+00 : f32
      %39 = vector.broadcast %cst_16 : f32 to vector<128x128xf32>
      %40 = arith.select %38, %9, %39 : vector<128x128xi1>, vector<128x128xf32>
      %cst_17 = arith.constant 0.000000e+00 : f32
      %41 = vector.broadcast %cst_17 : f32 to vector<128x128xf32>
      %42 = arith.select %38, %14, %41 : vector<128x128xi1>, vector<128x128xf32>
      %43 = arith.mulf %40, %42 : vector<128x128xf32>
      %44 = math.sqrt %43 : vector<128x128xf32>
      %c0_18 = arith.constant 0 : index
      %c0_19 = arith.constant 0 : index
      %45 = vector.load %arg9[%c0_18, %c0_19] : memref<8x128xf32, #tpu.memory_space<vmem>>, vector<1x128xf32>
      %cst_20 = arith.constant dense<0.000000e+00> : vector<128xf32>
      %46 = vector.multi_reduction <add>, %40, %cst_20 [0] : vector<128x128xf32> to vector<128xf32>
      %47 = vector.shape_cast %46 : vector<128xf32> to vector<1x128xf32>
      %48 = arith.addf %45, %47 : vector<1x128xf32>
      %c0_21 = arith.constant 0 : index
      %c0_22 = arith.constant 0 : index
      %49 = vector.load %arg9[%c0_21, %c0_22] : memref<8x128xf32, #tpu.memory_space<vmem>>, vector<1x128xf32>
      tpu.vector_store %arg9[%c0_21, %c0_22], %48 {strides = array<i32>} : memref<8x128xf32, #tpu.memory_space<vmem>>, vector<1x128xf32>,
      %c1 = arith.constant 1 : index
      %c0_23 = arith.constant 0 : index
      %50 = vector.load %arg9[%c1, %c0_23] : memref<8x128xf32, #tpu.memory_space<vmem>>, vector<1x128xf32>
      %cst_24 = arith.constant dense<0.000000e+00> : vector<128xf32>
      %51 = vector.multi_reduction <add>, %42, %cst_24 [0] : vector<128x128xf32> to vector<128xf32>
      %52 = vector.shape_cast %51 : vector<128xf32> to vector<1x128xf32>
      %53 = arith.addf %50, %52 : vector<1x128xf32>
      %c1_25 = arith.constant 1 : index
      %c0_26 = arith.constant 0 : index
      %54 = vector.load %arg9[%c1_25, %c0_26] : memref<8x128xf32, #tpu.memory_space<vmem>>, vector<1x128xf32>
      tpu.vector_store %arg9[%c1_25, %c0_26], %53 {strides = array<i32>} : memref<8x128xf32, #tpu.memory_space<vmem>>, vector<1x128xf32>,
      %c2 = arith.constant 2 : index
      %c0_27 = arith.constant 0 : index
      %55 = vector.load %arg9[%c2, %c0_27] : memref<8x128xf32, #tpu.memory_space<vmem>>, vector<1x128xf32>
      %cst_28 = arith.constant dense<0.000000e+00> : vector<128xf32>
      %56 = vector.multi_reduction <add>, %44, %cst_28 [0] : vector<128x128xf32> to vector<128xf32>
      %57 = vector.shape_cast %56 : vector<128xf32> to vector<1x128xf32>
      %58 = arith.addf %55, %57 : vector<1x128xf32>
      %c2_29 = arith.constant 2 : index
      %c0_30 = arith.constant 0 : index
      %59 = vector.load %arg9[%c2_29, %c0_30] : memref<8x128xf32, #tpu.memory_space<vmem>>, vector<1x128xf32>
      tpu.vector_store %arg9[%c2_29, %c0_30], %58 {strides = array<i32>} : memref<8x128xf32, #tpu.memory_space<vmem>>, vector<1x128xf32>,
    } else {
    }
    return
  }
  func.func @transform_0(%arg0: i32, %arg1: i32, %arg2: memref<2xi32, #tpu.memory_space<smem>>, %arg3: memref<2xi32, #tpu.memory_space<smem>>, %arg4: memref<2xi32, #tpu.memory_space<smem>>) -> (i32, i32) {
    %c1_i32 = arith.constant 1 : i32
    %0 = arith.muli %arg0, %c1_i32 : i32
    %1 = arith.addi %0, %arg1 : i32
    %2 = arith.index_cast %1 : i32 to index
    %3 = memref.load %arg2[%2] : memref<2xi32, #tpu.memory_space<smem>>
    %c0_i32 = arith.constant 0 : i32
    %c0_i32_0 = arith.constant 0 : i32
    return %3, %c0_i32 : i32, i32
  }
  func.func @transform_1(%arg0: i32, %arg1: i32, %arg2: memref<2xi32, #tpu.memory_space<smem>>, %arg3: memref<2xi32, #tpu.memory_space<smem>>, %arg4: memref<2xi32, #tpu.memory_space<smem>>) -> (i32, i32) {
    %c1_i32 = arith.constant 1 : i32
    %0 = arith.muli %arg0, %c1_i32 : i32
    %1 = arith.addi %0, %arg1 : i32
    %2 = arith.index_cast %1 : i32 to index
    %3 = memref.load %arg3[%2] : memref<2xi32, #tpu.memory_space<smem>>
    %c0_i32 = arith.constant 0 : i32
    %c0_i32_0 = arith.constant 0 : i32
    return %3, %c0_i32 : i32, i32
  }
  func.func @transform_2(%arg0: i32, %arg1: i32, %arg2: memref<2xi32, #tpu.memory_space<smem>>, %arg3: memref<2xi32, #tpu.memory_space<smem>>, %arg4: memref<2xi32, #tpu.memory_space<smem>>) -> (i32, i32) {
    %c1_i32 = arith.constant 1 : i32
    %0 = arith.muli %arg0, %c1_i32 : i32
    %1 = arith.addi %0, %arg1 : i32
    %2 = arith.index_cast %1 : i32 to index
    %3 = memref.load %arg2[%2] : memref<2xi32, #tpu.memory_space<smem>>
    %c0_i32 = arith.constant 0 : i32
    %c0_i32_0 = arith.constant 0 : i32
    return %3, %c0_i32 : i32, i32
  }
  func.func @transform_3(%arg0: i32, %arg1: i32, %arg2: memref<2xi32, #tpu.memory_space<smem>>, %arg3: memref<2xi32, #tpu.memory_space<smem>>, %arg4: memref<2xi32, #tpu.memory_space<smem>>) -> (i32, i32) {
    %c1_i32 = arith.constant 1 : i32
    %0 = arith.muli %arg0, %c1_i32 : i32
    %1 = arith.addi %0, %arg1 : i32
    %2 = arith.index_cast %1 : i32 to index
    %3 = memref.load %arg3[%2] : memref<2xi32, #tpu.memory_space<smem>>
    %c0_i32 = arith.constant 0 : i32
    %c0_i32_0 = arith.constant 0 : i32
    return %3, %c0_i32 : i32, i32
  }
  func.func @transform_4(%arg0: i32, %arg1: i32, %arg2: memref<2xi32, #tpu.memory_space<smem>>, %arg3: memref<2xi32, #tpu.memory_space<smem>>, %arg4: memref<2xi32, #tpu.memory_space<smem>>) -> (i32, i32) {
    %c0_i32 = arith.constant 0 : i32
    %c0_i32_0 = arith.constant 0 : i32
    return %arg0, %c0_i32 : i32, i32
  }
}

</mosaic_0001>

<llo_original>
// kernel: nsa_loss_adapted.3
$region0: #{nsa_loss_adapted.3}
  #allocation0 [shape = 'u32[]', space=smem, size = 0x4, offset = 0x4, fixed_abs, tag = 'smem constant byte address 0x4 - core index']
  #allocation1 [shape = 'u32[144,128]{1,0:T(1,128)}', space=vmem, size = 0x12000, scoped, tag = 'internal scratch']
  #allocation2 [shape = 's32[1]{0}', space=sflag, size = 0x4, scoped, tag = 'scoped memory for nsa_loss_adapted.3']
  #allocation3 [shape = 'u8[512]{0}', space=smem, size = 0x200, scoped, tag = 'prefetched SMEM operand 0']
  #allocation4 [shape = 'u8[512]{0}', space=smem, size = 0x200, scoped, tag = 'prefetched SMEM operand 1']
  #allocation5 [shape = 'u8[512]{0}', space=smem, size = 0x200, scoped, tag = 'prefetched SMEM operand 2']
  %s0 = inlined_call_operand.vmem [shape: s32[2], index: 0, kind: input, shape index: {}, may-alias: {0,1}]
  %s1 = inlined_call_operand.vmem [shape: s32[2], index: 1, kind: input, shape index: {}, may-alias: {0,1}]
  %s2 = inlined_call_operand.vmem [shape: s32[2], index: 2, kind: input, shape index: {}]
  %s3 = inlined_call_operand.vmem [shape: f32[128,34], index: 3, kind: input, shape index: {}]
  %s4 = inlined_call_operand.vmem [shape: f32[128,34], index: 4, kind: input, shape index: {}]
  %s5 = inlined_call_operand.vmem [shape: f32[128,18], index: 5, kind: input, shape index: {}]
  %s6 = inlined_call_operand.vmem [shape: f32[128,18], index: 6, kind: input, shape index: {}]
  %s7 = inlined_call_operand.vmem [shape: f32[16,128], index: 7, kind: output, shape index: {}]
  %s8 = sld [smem:[#allocation0]]
  $region61: #{nsa_loss_adapted.3} parent=0
    _
  %s10 = ssub.s32 1, %s8
  %s11 = scalar_select 0, %s10, %s8
  %s12 = sshll.u32 %s0, 4
  %s13 = int_to_ptr.vmem [resolvable:$true] %s12
  %15 = dma.vmem_to_smem %s13, 16, [#allocation3], [#allocation2]
  %s16 = sshll.u32 %s1, 4
  %s17 = int_to_ptr.vmem [resolvable:$true] %s16
  %19 = dma.vmem_to_smem %s17, 16, [#allocation4], [#allocation2]
  %s20 = sshll.u32 %s2, 4
  %s21 = int_to_ptr.vmem [resolvable:$true] %s20
  %23 = dma.vmem_to_smem %s21, 16, [#allocation5], [#allocation2]
  %24 = dma.done [#allocation2], 48
  %25 = sfence
  loop: start=0, step=1, limit=4
  $region2: #{nsa_loss_adapted.3} parent=0 // loop_pre_header
    _
  $region3: #{nsa_loss_adapted.3} parent=0 // loop_header
    %s27 = sphi 0, %s31
    %p28 = scmp.ge.s32.totalorder %s27, 4
    %s34 = sphi 0, %s46
    %s35 = sphi 0, %s42
    %s36 = sphi 0, %s34
    %s37 = sphi 0, %s35
    %s38 = sphi 0, %s36
    %s39 = sphi 0, %s37
    %s53 = sphi 0, %s55
    %s56 = sphi 0, %s53
    %s57 = sphi 0, %s56
    %s73 = sphi 0, %s57
    %s83 = sphi 0, %s85
    %s86 = sphi 0, %s83
    %s87 = sphi 0, %s86
    %s103 = sphi 0, %s87
    %s113 = sphi 0, %s115
    %s116 = sphi 0, %s113
    %s117 = sphi 0, %s116
    %s133 = sphi 0, %s117
    %s143 = sphi 0, %s145
    %s146 = sphi 0, %s143
    %s147 = sphi 0, %s146
    %s163 = sphi 0, %s147
    %s169 = sphi 0, %s171
    %s172 = sphi 0, %s169
    %s173 = sphi 0, %s172
    %s189 = sphi 0, %s173
  $region4: #{nsa_loss_adapted.3} parent=0 // loop_header_branch
    %30 = sbr.rel (%p28) target = $region8
  $region5: #{nsa_loss_adapted.3} parent=0 // loop_body
    %s32 = ssub.s32 %s27, 1
    %s33 = ssub.s32 %s27, 2
    %s40 = sadd.s32 1, %s35
    %p41 = scmp.ge.s32.totalorder %s40, 1
    %s42 = scalar_select %p41, 0, %s40
    %s43 = sadd.s32 1, %s34
    %s44 = scalar_select %p41, %s43, %s34
    %p45 = scmp.ge.s32.totalorder %s44, 2
    %s46 = scalar_select %p45, 0, %s44
    %s47 = sadd.s32 %s34, %s35
    %s48 = sld [smem:[#allocation3 + %s47]]
    %s49 = sadd.s32 %s46, %s42
    %s50 = sld [smem:[#allocation3 + %s49]]
    %s51 = ssub.s32 %s48, %s50
    %p52 = scmp.eq.s32.totalorder %s51, 0
    %s54 = sadd.s32 %s53, 1
    %s55 = scalar_select %p52, %s53, %s54
    %p58 = pneg %p52
    %p59 = scmp.eq.s32.totalorder %s27, 1
    %p60 = por %p58, %p59
    %p61 = scmp.ne.s32.totalorder %s53, %s56
    %p62 = scmp.eq.s32.totalorder %s27, 0
    %p63 = por %p61, %p62
    %p64 = scmp.ne.s32.totalorder %s53, %s56
    %p65 = scmp.eq.s32.totalorder %s32, 1
    %p66 = por %p64, %p65
    %p67 = scmp.ne.s32.totalorder %s56, %s57
    %p68 = scmp.eq.s32.totalorder %s32, 0
    %p69 = por %p67, %p68
    %p70 = scmp.ne.s32.totalorder %s56, %s57
    %p71 = scmp.eq.s32.totalorder %s33, 1
    %p72 = por %p70, %p71
    %p74 = scmp.ne.s32.totalorder %s57, %s73
    %p75 = scmp.eq.s32.totalorder %s33, 0
    %p76 = por %p74, %p75
    %s77 = sadd.s32 %s34, %s35
    %s78 = sld [smem:[#allocation4 + %s77]]
    %s79 = sadd.s32 %s46, %s42
    %s80 = sld [smem:[#allocation4 + %s79]]
    %s81 = ssub.s32 %s78, %s80
    %p82 = scmp.eq.s32.totalorder %s81, 0
    %s84 = sadd.s32 %s83, 1
    %s85 = scalar_select %p82, %s83, %s84
    %p88 = pneg %p82
    %p89 = scmp.eq.s32.totalorder %s27, 1
    %p90 = por %p88, %p89
    %p91 = scmp.ne.s32.totalorder %s83, %s86
    %p92 = scmp.eq.s32.totalorder %s27, 0
    %p93 = por %p91, %p92
    %p94 = scmp.ne.s32.totalorder %s83, %s86
    %p95 = scmp.eq.s32.totalorder %s32, 1
    %p96 = por %p94, %p95
    %p97 = scmp.ne.s32.totalorder %s86, %s87
    %p98 = scmp.eq.s32.totalorder %s32, 0
    %p99 = por %p97, %p98
    %p100 = scmp.ne.s32.totalorder %s86, %s87
    %p101 = scmp.eq.s32.totalorder %s33, 1
    %p102 = por %p100, %p101
    %p104 = scmp.ne.s32.totalorder %s87, %s103
    %p105 = scmp.eq.s32.totalorder %s33, 0
    %p106 = por %p104, %p105
    %s107 = sadd.s32 %s34, %s35
    %s108 = sld [smem:[#allocation3 + %s107]]
    %s109 = sadd.s32 %s46, %s42
    %s110 = sld [smem:[#allocation3 + %s109]]
    %s111 = ssub.s32 %s108, %s110
    %p112 = scmp.eq.s32.totalorder %s111, 0
    %s114 = sadd.s32 %s113, 1
    %s115 = scalar_select %p112, %s113, %s114
    %p118 = pneg %p112
    %p119 = scmp.eq.s32.totalorder %s27, 1
    %p120 = por %p118, %p119
    %p121 = scmp.ne.s32.totalorder %s113, %s116
    %p122 = scmp.eq.s32.totalorder %s27, 0
    %p123 = por %p121, %p122
    %p124 = scmp.ne.s32.totalorder %s113, %s116
    %p125 = scmp.eq.s32.totalorder %s32, 1
    %p126 = por %p124, %p125
    %p127 = scmp.ne.s32.totalorder %s116, %s117
    %p128 = scmp.eq.s32.totalorder %s32, 0
    %p129 = por %p127, %p128
    %p130 = scmp.ne.s32.totalorder %s116, %s117
    %p131 = scmp.eq.s32.totalorder %s33, 1
    %p132 = por %p130, %p131
    %p134 = scmp.ne.s32.totalorder %s117, %s133
    %p135 = scmp.eq.s32.totalorder %s33, 0
    %p136 = por %p134, %p135
    %s137 = sadd.s32 %s34, %s35
    %s138 = sld [smem:[#allocation4 + %s137]]
    %s139 = sadd.s32 %s46, %s42
    %s140 = sld [smem:[#allocation4 + %s139]]
    %s141 = ssub.s32 %s138, %s140
    %p142 = scmp.eq.s32.totalorder %s141, 0
    %s144 = sadd.s32 %s143, 1
    %s145 = scalar_select %p142, %s143, %s144
    %p148 = pneg %p142
    %p149 = scmp.eq.s32.totalorder %s27, 1
    %p150 = por %p148, %p149
    %p151 = scmp.ne.s32.totalorder %s143, %s146
    %p152 = scmp.eq.s32.totalorder %s27, 0
    %p153 = por %p151, %p152
    %p154 = scmp.ne.s32.totalorder %s143, %s146
    %p155 = scmp.eq.s32.totalorder %s32, 1
    %p156 = por %p154, %p155
    %p157 = scmp.ne.s32.totalorder %s146, %s147
    %p158 = scmp.eq.s32.totalorder %s32, 0
    %p159 = por %p157, %p158
    %p160 = scmp.ne.s32.totalorder %s146, %s147
    %p161 = scmp.eq.s32.totalorder %s33, 1
    %p162 = por %p160, %p161
    %p164 = scmp.ne.s32.totalorder %s147, %s163
    %p165 = scmp.eq.s32.totalorder %s33, 0
    %p166 = por %p164, %p165
    %s167 = ssub.s32 %s34, %s46
    %p168 = scmp.eq.s32.totalorder %s167, 0
    %s170 = sadd.s32 %s169, 1
    %s171 = scalar_select %p168, %s169, %s170
    %p174 = pneg %p168
    %p175 = scmp.eq.s32.totalorder %s27, 1
    %p176 = por %p174, %p175
    %p177 = scmp.ne.s32.totalorder %s169, %s172
    %p178 = scmp.eq.s32.totalorder %s27, 0
    %p179 = por %p177, %p178
    %p180 = scmp.ne.s32.totalorder %s169, %s172
    %p181 = scmp.eq.s32.totalorder %s32, 1
    %p182 = por %p180, %p181
    %p183 = scmp.ne.s32.totalorder %s172, %s173
    %p184 = scmp.eq.s32.totalorder %s32, 0
    %p185 = por %p183, %p184
    %p186 = scmp.ne.s32.totalorder %s172, %s173
    %p187 = scmp.eq.s32.totalorder %s33, 1
    %p188 = por %p186, %p187
    %p190 = scmp.ne.s32.totalorder %s173, %s189
    %p191 = scmp.eq.s32.totalorder %s33, 0
    %p192 = por %p190, %p191
    %p193 = scmp.le.s32.totalorder 1, %s27
    %p194 = scmp.lt.s32.totalorder %s27, 3
    %p195 = pnand %p193, %p194
    %p196 = pneg %p195
    // Predicated region
    $region9: #{nsa_loss_adapted.3} parent=5 // pred_check
      _
    $region10: #{nsa_loss_adapted.3} parent=5 // pred_check_branch
      %198 = sbr.rel (%p195) target = $region12
    $region11: #{nsa_loss_adapted.3} parent=5 // pred_region
      %s199 = ssub.s32 %s27, 1
    $region12: #{nsa_loss_adapted.3} parent=5 // pred_fallthru
      _
    %p200 = scmp.lt.s32.totalorder %s27, 2
    // Predicated region
    $region13: #{nsa_loss_adapted.3} parent=5 // pred_check
      %p201 = pneg %p200
    $region14: #{nsa_loss_adapted.3} parent=5 // pred_check_branch
      %203 = sbr.rel (%p201) target = $region16
    $region15: #{nsa_loss_adapted.3} parent=5 // pred_region
      // Predicated region
      $region17: #{nsa_loss_adapted.3} parent=15 // pred_check
        %p204 = pneg %p63
      $region18: #{nsa_loss_adapted.3} parent=15 // pred_check_branch
        %206 = sbr.rel (%p204) target = $region20
      $region19: #{nsa_loss_adapted.3} parent=15 // pred_region
        %s207 = sadd.s32 %s34, %s35
        %s208 = sld [smem:[#allocation3 + %s207]]
        %s209 = smul.u32 16, %s208
        %p210 = scmp.lt.s32.totalorder %s209, 15
        %s211 = scalar_select %p210, %s209, 15
        %s212 = smul.addr %s211, 8
        %s213 = scalar_lea.vmem %s3, %s212
        %s214 = sadd.s32 %s34, %s35
        %s215 = sld [smem:[#allocation3 + %s214]]
        %s216 = smul.u32 16, %s215
      $region20: #{nsa_loss_adapted.3} parent=15 // pred_fallthru
        _
      // Predicated region
      $region21: #{nsa_loss_adapted.3} parent=15 // pred_check
        %p217 = pneg %p93
      $region22: #{nsa_loss_adapted.3} parent=15 // pred_check_branch
        %219 = sbr.rel (%p217) target = $region24
      $region23: #{nsa_loss_adapted.3} parent=15 // pred_region
        %s220 = sadd.s32 %s34, %s35
        %s221 = sld [smem:[#allocation4 + %s220]]
        %s222 = smul.u32 16, %s221
        %p223 = scmp.lt.s32.totalorder %s222, 15
        %s224 = scalar_select %p223, %s222, 15
        %s225 = smul.addr %s224, 8
        %s226 = scalar_lea.vmem %s4, %s225
        %s227 = sadd.s32 %s34, %s35
        %s228 = sld [smem:[#allocation4 + %s227]]
        %s229 = smul.u32 16, %s228
      $region24: #{nsa_loss_adapted.3} parent=15 // pred_fallthru
        _
      // Predicated region
      $region25: #{nsa_loss_adapted.3} parent=15 // pred_check
        %p230 = pneg %p123
      $region26: #{nsa_loss_adapted.3} parent=15 // pred_check_branch
        %232 = sbr.rel (%p230) target = $region28
      $region27: #{nsa_loss_adapted.3} parent=15 // pred_region
        %s233 = sadd.s32 %s34, %s35
        %s234 = sld [smem:[#allocation3 + %s233]]
        %s235 = smul.u32 16, %s234
        %p236 = scmp.lt.s32.totalorder %s235, 15
        %s237 = scalar_select %p236, %s235, 15
        %s238 = smul.addr %s237, 8
        %s239 = scalar_lea.vmem %s5, %s238
        %s240 = sadd.s32 %s34, %s35
        %s241 = sld [smem:[#allocation3 + %s240]]
        %s242 = smul.u32 16, %s241
      $region28: #{nsa_loss_adapted.3} parent=15 // pred_fallthru
        _
      // Predicated region
      $region29: #{nsa_loss_adapted.3} parent=15 // pred_check
        %p243 = pneg %p153
      $region30: #{nsa_loss_adapted.3} parent=15 // pred_check_branch
        %245 = sbr.rel (%p243) target = $region32
      $region31: #{nsa_loss_adapted.3} parent=15 // pred_region
        %s246 = sadd.s32 %s34, %s35
        %s247 = sld [smem:[#allocation4 + %s246]]
        %s248 = smul.u32 16, %s247
        %p249 = scmp.lt.s32.totalorder %s248, 15
        %s250 = scalar_select %p249, %s248, 15
        %s251 = smul.addr %s250, 8
        %s252 = scalar_lea.vmem %s6, %s251
        %s253 = sadd.s32 %s34, %s35
        %s254 = sld [smem:[#allocation4 + %s253]]
        %s255 = smul.u32 16, %s254
      $region32: #{nsa_loss_adapted.3} parent=15 // pred_fallthru
        _
    $region16: #{nsa_loss_adapted.3} parent=5 // pred_fallthru
      _
    %p256 = scmp.le.s32.totalorder 1, %s27
    %p257 = scmp.lt.s32.totalorder %s27, 3
    %p258 = pnand %p256, %p257
    %p259 = pneg %p258
    // Predicated region
    $region33: #{nsa_loss_adapted.3} parent=5 // pred_check
      _
    $region34: #{nsa_loss_adapted.3} parent=5 // pred_check_branch
      %261 = sbr.rel (%p258) target = $region36
    $region35: #{nsa_loss_adapted.3} parent=5 // pred_region
      %s262 = ssub.s32 %s27, 1
      %s263 = sadd.s32 %s36, %s37
      %s264 = sld [smem:[#allocation3 + %s263]]
      %s265 = smul.u32 16, %s264
      %p266 = scmp.lt.s32.totalorder %s265, 15
      %s267 = scalar_select %p266, %s265, 15
      %s268 = smul.addr %s267, 8
      %s269 = scalar_lea.vmem %s3, %s268
      %p270 = pneg %p69
      %p271 = pneg %p66
      %s272 = sadd.s32 %s36, %s37
      %s273 = sld [smem:[#allocation4 + %s272]]
      %s274 = smul.u32 16, %s273
      %p275 = scmp.lt.s32.totalorder %s274, 15
      %s276 = scalar_select %p275, %s274, 15
      %s277 = smul.addr %s276, 8
      %s278 = scalar_lea.vmem %s4, %s277
      %p279 = pneg %p99
      %p280 = pneg %p96
      %s281 = sadd.s32 %s36, %s37
      %s282 = sld [smem:[#allocation3 + %s281]]
      %s283 = smul.u32 16, %s282
      %p284 = scmp.lt.s32.totalorder %s283, 15
      %s285 = scalar_select %p284, %s283, 15
      %s286 = smul.addr %s285, 8
      %s287 = scalar_lea.vmem %s5, %s286
      %p288 = pneg %p129
      %p289 = pneg %p126
      %s290 = sadd.s32 %s36, %s37
      %s291 = sld [smem:[#allocation4 + %s290]]
      %s292 = smul.u32 16, %s291
      %p293 = scmp.lt.s32.totalorder %s292, 15
      %s294 = scalar_select %p293, %s292, 15
      %s295 = smul.addr %s294, 8
      %s296 = scalar_lea.vmem %s6, %s295
      %p297 = pneg %p159
      %p298 = pneg %p156
      %p299 = pneg %p185
      %p300 = pneg %p182
      %p301 = scmp.lt.s32.totalorder %s36, 1
      %s302 = scalar_select %p301, %s36, 1
      %s303 = smul.addr %s302, 8
      %s304 = scalar_lea.vmem %s7, %s303
      %s305 = sadd.s32 %s36, %s37
      %s306 = sld [smem:[#allocation3 + %s305]]
      %s307 = smul.u32 16, %s306
      %p308 = scmp.lt.s32.totalorder %s307, 15
      %s309 = scalar_select %p308, %s307, 15
      %s310 = smul.addr %s309, 8
      %s311 = scalar_lea.vmem %s3, %s310
      %s312 = sadd.s32 %s36, %s37
      %s313 = sld [smem:[#allocation3 + %s312]]
      %s314 = smul.u32 16, %s313
      %s315 = sadd.s32 %s36, %s37
      %s316 = sld [smem:[#allocation4 + %s315]]
      %s317 = smul.u32 16, %s316
      %p318 = scmp.lt.s32.totalorder %s317, 15
      %s319 = scalar_select %p318, %s317, 15
      %s320 = smul.addr %s319, 8
      %s321 = scalar_lea.vmem %s4, %s320
      %s322 = sadd.s32 %s36, %s37
      %s323 = sld [smem:[#allocation4 + %s322]]
      %s324 = smul.u32 16, %s323
      %s325 = sadd.s32 %s36, %s37
      %s326 = sld [smem:[#allocation3 + %s325]]
      %s327 = smul.u32 16, %s326
      %p328 = scmp.lt.s32.totalorder %s327, 15
      %s329 = scalar_select %p328, %s327, 15
      %s330 = smul.addr %s329, 8
      %s331 = scalar_lea.vmem %s5, %s330
      %s332 = sadd.s32 %s36, %s37
      %s333 = sld [smem:[#allocation3 + %s332]]
      %s334 = smul.u32 16, %s333
      %s335 = sadd.s32 %s36, %s37
      %s336 = sld [smem:[#allocation4 + %s335]]
      %s337 = smul.u32 16, %s336
      %p338 = scmp.lt.s32.totalorder %s337, 15
      %s339 = scalar_select %p338, %s337, 15
      %s340 = smul.addr %s339, 8
      %s341 = scalar_lea.vmem %s6, %s340
      %s342 = sadd.s32 %s36, %s37
      %s343 = sld [smem:[#allocation4 + %s342]]
      %s344 = smul.u32 16, %s343
      %p345 = scmp.lt.s32.totalorder %s36, 1
      %s346 = scalar_select %p345, %s36, 1
      %s347 = smul.addr %s346, 8
      %s348 = scalar_lea.vmem %s7, %s347
      %s349 = sadd.s32 %s36, %s37
      %p350 = scmp.eq.s32.totalorder %s37, 0
      // Predicated region
      $region37: #{nsa_loss_adapted.3} parent=35 // pred_check
        %p351 = pneg %p350
      $region38: #{nsa_loss_adapted.3} parent=35 // pred_check_branch
        %353 = sbr.rel (%p351) target = $region40
      $region39: #{nsa_loss_adapted.3} parent=35 // pred_region
        %354 = vst [vmem:[%s348] sm:$0xff] 0.0
      $region40: #{nsa_loss_adapted.3} parent=35 // pred_fallthru
        _
      %v355 = vld [vmem:[%s311] sm:$0xff]
      %v356 = vld [vmem:[%s311 + $0x8] sm:$0xff]
      %v357 = vld [vmem:[%s311 + $0x10] sm:$0xff]
      %v358 = vld [vmem:[%s311 + $0x18] sm:$0xff]
      %v359 = vld [vmem:[%s311 + $0x20] sm:$0xff]
      %v360 = vld [vmem:[%s311 + $0x28] sm:$0xff]
      %v361 = vld [vmem:[%s311 + $0x30] sm:$0xff]
      %v362 = vld [vmem:[%s311 + $0x38] sm:$0xff]
      %v363 = vld [vmem:[%s311 + $0x40] sm:$0xff]
      %v364 = vld [vmem:[%s311 + $0x48] sm:$0xff]
      %v365 = vld [vmem:[%s311 + $0x50] sm:$0xff]
      %v366 = vld [vmem:[%s311 + $0x58] sm:$0xff]
      %v367 = vld [vmem:[%s311 + $0x60] sm:$0xff]
      %v368 = vld [vmem:[%s311 + $0x68] sm:$0xff]
      %v369 = vld [vmem:[%s311 + $0x70] sm:$0xff]
      %v370 = vld [vmem:[%s311 + $0x78] sm:$0xff]
      %v371 = vld [vmem:[%s321] sm:$0xff]
      %v372 = vld [vmem:[%s321 + $0x8] sm:$0xff]
      %v373 = vld [vmem:[%s321 + $0x10] sm:$0xff]
      %v374 = vld [vmem:[%s321 + $0x18] sm:$0xff]
      %v375 = vld [vmem:[%s321 + $0x20] sm:$0xff]
      %v376 = vld [vmem:[%s321 + $0x28] sm:$0xff]
      %v377 = vld [vmem:[%s321 + $0x30] sm:$0xff]
      %v378 = vld [vmem:[%s321 + $0x38] sm:$0xff]
      %v379 = vld [vmem:[%s321 + $0x40] sm:$0xff]
      %v380 = vld [vmem:[%s321 + $0x48] sm:$0xff]
      %v381 = vld [vmem:[%s321 + $0x50] sm:$0xff]
      %v382 = vld [vmem:[%s321 + $0x58] sm:$0xff]
      %v383 = vld [vmem:[%s321 + $0x60] sm:$0xff]
      %v384 = vld [vmem:[%s321 + $0x68] sm:$0xff]
      %v385 = vld [vmem:[%s321 + $0x70] sm:$0xff]
      %v386 = vld [vmem:[%s321 + $0x78] sm:$0xff]
      %vm387 = vcmask 277504
      %v389 = vsel %vm387, %v355, 0
      %v392 = vsel %vm387, %v356, 0
      %v395 = vsel %vm387, %v357, 0
      %v398 = vsel %vm387, %v358, 0
      %v401 = vsel %vm387, %v359, 0
      %v404 = vsel %vm387, %v360, 0
      %v407 = vsel %vm387, %v361, 0
      %v410 = vsel %vm387, %v362, 0
      %v413 = vsel %vm387, %v363, 0
      %v416 = vsel %vm387, %v364, 0
      %v419 = vsel %vm387, %v365, 0
      %v422 = vsel %vm387, %v366, 0
      %v425 = vsel %vm387, %v367, 0
      %v428 = vsel %vm387, %v368, 0
      %v431 = vsel %vm387, %v369, 0
      %v434 = vsel %vm387, %v370, 0
      %v437 = vsel %vm387, %v371, 0
      %v440 = vsel %vm387, %v372, 0
      %v443 = vsel %vm387, %v373, 0
      %v446 = vsel %vm387, %v374, 0
      %v449 = vsel %vm387, %v375, 0
      %v452 = vsel %vm387, %v376, 0
      %v455 = vsel %vm387, %v377, 0
      %v458 = vsel %vm387, %v378, 0
      %v461 = vsel %vm387, %v379, 0
      %v464 = vsel %vm387, %v380, 0
      %v467 = vsel %vm387, %v381, 0
      %v470 = vsel %vm387, %v382, 0
      %v473 = vsel %vm387, %v383, 0
      %v476 = vsel %vm387, %v384, 0
      %v479 = vsel %vm387, %v385, 0
      %v482 = vsel %vm387, %v386, 0
      %484 = vmatprep.subr.mxu0 0.0
      %485 = vmatpush1.xpose.msra.mxu0 %v437
      %486 = vmatprep.subr.mxu0 0.0
      %487 = vmatpush1.xpose.msra.mxu0 %v440
      %488 = vmatprep.subr.mxu0 0.0
      %489 = vmatpush1.xpose.msra.mxu0 %v443
      %490 = vmatprep.subr.mxu0 0.0
      %491 = vmatpush1.xpose.msra.mxu0 %v446
      %492 = vmatprep.subr.mxu0 0.0
      %493 = vmatpush1.xpose.msra.mxu0 %v449
      %494 = vmatprep.subr.mxu0 0.0
      %495 = vmatpush1.xpose.msra.mxu0 %v452
      %496 = vmatprep.subr.mxu0 0.0
      %497 = vmatpush1.xpose.msra.mxu0 %v455
      %498 = vmatprep.subr.mxu0 0.0
      %499 = vmatpush1.xpose.msra.mxu0 %v458
      %500 = vmatprep.subr.mxu0 0.0
      %501 = vmatpush1.xpose.msra.mxu0 %v461
      %502 = vmatprep.subr.mxu0 0.0
      %503 = vmatpush1.xpose.msra.mxu0 %v464
      %504 = vmatprep.subr.mxu0 0.0
      %505 = vmatpush1.xpose.msra.mxu0 %v467
      %506 = vmatprep.subr.mxu0 0.0
      %507 = vmatpush1.xpose.msra.mxu0 %v470
      %508 = vmatprep.subr.mxu0 0.0
      %509 = vmatpush1.xpose.msra.mxu0 %v473
      %510 = vmatprep.subr.mxu0 0.0
      %511 = vmatpush1.xpose.msra.mxu0 %v476
      %512 = vmatprep.subr.mxu0 0.0
      %513 = vmatpush1.xpose.msra.mxu0 %v479
      %514 = vmatprep.subr.mxu0 0.0
      %515 = vmatpush1.xpose.msra.mxu0 %v482
      %516 = vmatprep.subr.mxu0 0.0
      %517 = vmatpush1.xpose.msra.mxu0 0.0
      %518 = vmatprep.subr.mxu0 0.0
      %519 = vmatpush1.xpose.msra.mxu0 0.0
      %520 = vmatprep.subr.mxu0 0.0
      %521 = vmatpush1.xpose.msra.mxu0 0.0
      %522 = vmatprep.subr.mxu0 0.0
      %523 = vmatpush1.xpose.msra.mxu0 0.0
      %524 = vmatprep.subr.mxu0 0.0
      %525 = vmatpush1.xpose.msra.mxu0 0.0
      %526 = vmatprep.subr.mxu0 0.0
      %527 = vmatpush1.xpose.msra.mxu0 0.0
      %528 = vmatprep.subr.mxu0 0.0
      %529 = vmatpush1.xpose.msra.mxu0 0.0
      %530 = vmatprep.subr.mxu0 0.0
      %531 = vmatpush1.xpose.msra.mxu0 0.0
      %532 = vmatprep.subr.mxu0 0.0
      %533 = vmatpush1.xpose.msra.mxu0 0.0
      %534 = vmatprep.subr.mxu0 0.0
      %535 = vmatpush1.xpose.msra.mxu0 0.0
      %536 = vmatprep.subr.mxu0 0.0
      %537 = vmatpush1.xpose.msra.mxu0 0.0
      %538 = vmatprep.subr.mxu0 0.0
      %539 = vmatpush1.xpose.msra.mxu0 0.0
      %540 = vmatprep.subr.mxu0 0.0
      %541 = vmatpush1.xpose.msra.mxu0 0.0
      %542 = vmatprep.subr.mxu0 0.0
      %543 = vmatpush1.xpose.msra.mxu0 0.0
      %544 = vmatprep.subr.mxu0 0.0
      %545 = vmatpush1.xpose.msra.mxu0 0.0
      %546 = vmatprep.subr.mxu0 0.0
      %547 = vmatpush1.xpose.msra.mxu0 0.0
      %548 = vmatprep.mubr.f32.mxu0 0.0
      %549 = vmatmul.mubr.f32.gmra.mrb[0].mxu0 %v389
      %v550 = vpop.f32.mrb[0].mxu0
      %v551 = vadd.f32 0.0, %v550
      %v552 = vpop.f32.mrb[0].mxu0
      %553 = vmatprep.mubr.f32.mxu0 0.0
      %554 = vmatmul.mubr.f32.gmra.mrb[0].mxu0 %v392
      %v555 = vpop.f32.mrb[0].mxu0
      %v556 = vadd.f32 0.0, %v555
      %v557 = vpop.f32.mrb[0].mxu0
      %558 = vmatprep.mubr.f32.mxu0 0.0
      %559 = vmatmul.mubr.f32.gmra.mrb[0].mxu0 %v395
      %v560 = vpop.f32.mrb[0].mxu0
      %v561 = vadd.f32 0.0, %v560
      %v562 = vpop.f32.mrb[0].mxu0
      %563 = vmatprep.mubr.f32.mxu0 0.0
      %564 = vmatmul.mubr.f32.gmra.mrb[0].mxu0 %v398
      %v565 = vpop.f32.mrb[0].mxu0
      %v566 = vadd.f32 0.0, %v565
      %v567 = vpop.f32.mrb[0].mxu0
      %568 = vmatprep.mubr.f32.mxu0 0.0
      %569 = vmatmul.mubr.f32.gmra.mrb[0].mxu0 %v401
      %v570 = vpop.f32.mrb[0].mxu0
      %v571 = vadd.f32 0.0, %v570
      %v572 = vpop.f32.mrb[0].mxu0
      %573 = vmatprep.mubr.f32.mxu0 0.0
      %574 = vmatmul.mubr.f32.gmra.mrb[0].mxu0 %v404
      %v575 = vpop.f32.mrb[0].mxu0
      %v576 = vadd.f32 0.0, %v575
      %v577 = vpop.f32.mrb[0].mxu0
      %578 = vmatprep.mubr.f32.mxu0 0.0
      %579 = vmatmul.mubr.f32.gmra.mrb[0].mxu0 %v407
      %v580 = vpop.f32.mrb[0].mxu0
      %v581 = vadd.f32 0.0, %v580
      %v582 = vpop.f32.mrb[0].mxu0
      %583 = vmatprep.mubr.f32.mxu0 0.0
      %584 = vmatmul.mubr.f32.gmra.mrb[0].mxu0 %v410
      %v585 = vpop.f32.mrb[0].mxu0
      %v586 = vadd.f32 0.0, %v585
      %v587 = vpop.f32.mrb[0].mxu0
      %588 = vmatprep.mubr.f32.mxu0 0.0
      %589 = vmatmul.mubr.f32.gmra.mrb[0].mxu0 %v413
      %v590 = vpop.f32.mrb[0].mxu0
      %v591 = vadd.f32 0.0, %v590
      %v592 = vpop.f32.mrb[0].mxu0
      %593 = vmatprep.mubr.f32.mxu0 0.0
      %594 = vmatmul.mubr.f32.gmra.mrb[0].mxu0 %v416
      %v595 = vpop.f32.mrb[0].mxu0
      %v596 = vadd.f32 0.0, %v595
      %v597 = vpop.f32.mrb[0].mxu0
      %598 = vmatprep.mubr.f32.mxu0 0.0
      %599 = vmatmul.mubr.f32.gmra.mrb[0].mxu0 %v419
      %v600 = vpop.f32.mrb[0].mxu0
      %v601 = vadd.f32 0.0, %v600
      %v602 = vpop.f32.mrb[0].mxu0
      %603 = vmatprep.mubr.f32.mxu0 0.0
      %604 = vmatmul.mubr.f32.gmra.mrb[0].mxu0 %v422
      %v605 = vpop.f32.mrb[0].mxu0
      %v606 = vadd.f32 0.0, %v605
      %v607 = vpop.f32.mrb[0].mxu0
      %608 = vmatprep.mubr.f32.mxu0 0.0
      %609 = vmatmul.mubr.f32.gmra.mrb[0].mxu0 %v425
      %v610 = vpop.f32.mrb[0].mxu0
      %v611 = vadd.f32 0.0, %v610
      %v612 = vpop.f32.mrb[0].mxu0
      %613 = vmatprep.mubr.f32.mxu0 0.0
      %614 = vmatmul.mubr.f32.gmra.mrb[0].mxu0 %v428
      %v615 = vpop.f32.mrb[0].mxu0
      %v616 = vadd.f32 0.0, %v615
      %v617 = vpop.f32.mrb[0].mxu0
      %618 = vmatprep.mubr.f32.mxu0 0.0
      %619 = vmatmul.mubr.f32.gmra.mrb[0].mxu0 %v431
      %v620 = vpop.f32.mrb[0].mxu0
      %v621 = vadd.f32 0.0, %v620
      %v622 = vpop.f32.mrb[0].mxu0
      %623 = vmatprep.mubr.f32.mxu0 0.0
      %624 = vmatmul.mubr.f32.gmra.mrb[0].mxu0 %v434
      %v625 = vpop.f32.mrb[0].mxu0
      %v626 = vadd.f32 0.0, %v625
      %v627 = vpop.f32.mrb[0].mxu0
      %628 = vdwg.mxu0
      %v629 = vmax.f32 %v551, 0.0
      %v630 = vmax.f32 %v556, 0.0
      %v631 = vmax.f32 %v561, 0.0
      %v632 = vmax.f32 %v566, 0.0
      %v633 = vmax.f32 %v571, 0.0
      %v634 = vmax.f32 %v576, 0.0
      %v635 = vmax.f32 %v581, 0.0
      %v636 = vmax.f32 %v586, 0.0
      %v637 = vmax.f32 %v591, 0.0
      %v638 = vmax.f32 %v596, 0.0
      %v639 = vmax.f32 %v601, 0.0
      %v640 = vmax.f32 %v606, 0.0
      %v641 = vmax.f32 %v611, 0.0
      %v642 = vmax.f32 %v616, 0.0
      %v643 = vmax.f32 %v621, 0.0
      %v644 = vmax.f32 %v626, 0.0
      %v645 = vld [vmem:[%s331] sm:$0xff]
      %v646 = vld [vmem:[%s331 + $0x8] sm:$0xff]
      %v647 = vld [vmem:[%s331 + $0x10] sm:$0xff]
      %v648 = vld [vmem:[%s331 + $0x18] sm:$0xff]
      %v649 = vld [vmem:[%s331 + $0x20] sm:$0xff]
      %v650 = vld [vmem:[%s331 + $0x28] sm:$0xff]
      %v651 = vld [vmem:[%s331 + $0x30] sm:$0xff]
      %v652 = vld [vmem:[%s331 + $0x38] sm:$0xff]
      %v653 = vld [vmem:[%s331 + $0x40] sm:$0xff]
      %v654 = vld [vmem:[%s331 + $0x48] sm:$0xff]
      %v655 = vld [vmem:[%s331 + $0x50] sm:$0xff]
      %v656 = vld [vmem:[%s331 + $0x58] sm:$0xff]
      %v657 = vld [vmem:[%s331 + $0x60] sm:$0xff]
      %v658 = vld [vmem:[%s331 + $0x68] sm:$0xff]
      %v659 = vld [vmem:[%s331 + $0x70] sm:$0xff]
      %v660 = vld [vmem:[%s331 + $0x78] sm:$0xff]
      %v661 = vld [vmem:[%s341] sm:$0xff]
      %v662 = vld [vmem:[%s341 + $0x8] sm:$0xff]
      %v663 = vld [vmem:[%s341 + $0x10] sm:$0xff]
      %v664 = vld [vmem:[%s341 + $0x18] sm:$0xff]
      %v665 = vld [vmem:[%s341 + $0x20] sm:$0xff]
      %v666 = vld [vmem:[%s341 + $0x28] sm:$0xff]
      %v667 = vld [vmem:[%s341 + $0x30] sm:$0xff]
      %v668 = vld [vmem:[%s341 + $0x38] sm:$0xff]
      %v669 = vld [vmem:[%s341 + $0x40] sm:$0xff]
      %v670 = vld [vmem:[%s341 + $0x48] sm:$0xff]
      %v671 = vld [vmem:[%s341 + $0x50] sm:$0xff]
      %v672 = vld [vmem:[%s341 + $0x58] sm:$0xff]
      %v673 = vld [vmem:[%s341 + $0x60] sm:$0xff]
      %v674 = vld [vmem:[%s341 + $0x68] sm:$0xff]
      %v675 = vld [vmem:[%s341 + $0x70] sm:$0xff]
      %v676 = vld [vmem:[%s341 + $0x78] sm:$0xff]
      %vm677 = vcmask 146432
      %v679 = vsel %vm677, %v645, 0
      %v682 = vsel %vm677, %v646, 0
      %v685 = vsel %vm677, %v647, 0
      %v688 = vsel %vm677, %v648, 0
      %v691 = vsel %vm677, %v649, 0
      %v694 = vsel %vm677, %v650, 0
      %v697 = vsel %vm677, %v651, 0
      %v700 = vsel %vm677, %v652, 0
      %v703 = vsel %vm677, %v653, 0
      %v706 = vsel %vm677, %v654, 0
      %v709 = vsel %vm677, %v655, 0
      %v712 = vsel %vm677, %v656, 0
      %v715 = vsel %vm677, %v657, 0
      %v718 = vsel %vm677, %v658, 0
      %v721 = vsel %vm677, %v659, 0
      %v724 = vsel %vm677, %v660, 0
      %v727 = vsel %vm677, %v661, 0
      %v730 = vsel %vm677, %v662, 0
      %v733 = vsel %vm677, %v663, 0
      %v736 = vsel %vm677, %v664, 0
      %v739 = vsel %vm677, %v665, 0
      %v742 = vsel %vm677, %v666, 0
      %v745 = vsel %vm677, %v667, 0
      %v748 = vsel %vm677, %v668, 0
      %v751 = vsel %vm677, %v669, 0
      %v754 = vsel %vm677, %v670, 0
      %v757 = vsel %vm677, %v671, 0
      %v760 = vsel %vm677, %v672, 0
      %v763 = vsel %vm677, %v673, 0
      %v766 = vsel %vm677, %v674, 0
      %v769 = vsel %vm677, %v675, 0
      %v772 = vsel %vm677, %v676, 0
      %774 = vmatprep.subr.mxu0 0.0
      %775 = vmatpush1.xpose.msra.mxu0 %v727
      %776 = vmatprep.subr.mxu0 0.0
      %777 = vmatpush1.xpose.msra.mxu0 %v730
      %778 = vmatprep.subr.mxu0 0.0
      %779 = vmatpush1.xpose.msra.mxu0 %v733
      %780 = vmatprep.subr.mxu0 0.0
      %781 = vmatpush1.xpose.msra.mxu0 %v736
      %782 = vmatprep.subr.mxu0 0.0
      %783 = vmatpush1.xpose.msra.mxu0 %v739
      %784 = vmatprep.subr.mxu0 0.0
      %785 = vmatpush1.xpose.msra.mxu0 %v742
      %786 = vmatprep.subr.mxu0 0.0
      %787 = vmatpush1.xpose.msra.mxu0 %v745
      %788 = vmatprep.subr.mxu0 0.0
      %789 = vmatpush1.xpose.msra.mxu0 %v748
      %790 = vmatprep.subr.mxu0 0.0
      %791 = vmatpush1.xpose.msra.mxu0 %v751
      %792 = vmatprep.subr.mxu0 0.0
      %793 = vmatpush1.xpose.msra.mxu0 %v754
      %794 = vmatprep.subr.mxu0 0.0
      %795 = vmatpush1.xpose.msra.mxu0 %v757
      %796 = vmatprep.subr.mxu0 0.0
      %797 = vmatpush1.xpose.msra.mxu0 %v760
      %798 = vmatprep.subr.mxu0 0.0
      %799 = vmatpush1.xpose.msra.mxu0 %v763
      %800 = vmatprep.subr.mxu0 0.0
      %801 = vmatpush1.xpose.msra.mxu0 %v766
      %802 = vmatprep.subr.mxu0 0.0
      %803 = vmatpush1.xpose.msra.mxu0 %v769
      %804 = vmatprep.subr.mxu0 0.0
      %805 = vmatpush1.xpose.msra.mxu0 %v772
      %806 = vmatprep.subr.mxu0 0.0
      %807 = vmatpush1.xpose.msra.mxu0 0.0
      %808 = vmatprep.subr.mxu0 0.0
      %809 = vmatpush1.xpose.msra.mxu0 0.0
      %810 = vmatprep.subr.mxu0 0.0
      %811 = vmatpush1.xpose.msra.mxu0 0.0
      %812 = vmatprep.subr.mxu0 0.0
      %813 = vmatpush1.xpose.msra.mxu0 0.0
      %814 = vmatprep.subr.mxu0 0.0
      %815 = vmatpush1.xpose.msra.mxu0 0.0
      %816 = vmatprep.subr.mxu0 0.0
      %817 = vmatpush1.xpose.msra.mxu0 0.0
      %818 = vmatprep.subr.mxu0 0.0
      %819 = vmatpush1.xpose.msra.mxu0 0.0
      %820 = vmatprep.subr.mxu0 0.0
      %821 = vmatpush1.xpose.msra.mxu0 0.0
      %822 = vmatprep.subr.mxu0 0.0
      %823 = vmatpush1.xpose.msra.mxu0 0.0
      %824 = vmatprep.subr.mxu0 0.0
      %825 = vmatpush1.xpose.msra.mxu0 0.0
      %826 = vmatprep.subr.mxu0 0.0
      %827 = vmatpush1.xpose.msra.mxu0 0.0
      %828 = vmatprep.subr.mxu0 0.0
      %829 = vmatpush1.xpose.msra.mxu0 0.0
      %830 = vmatprep.subr.mxu0 0.0
      %831 = vmatpush1.xpose.msra.mxu0 0.0
      %832 = vmatprep.subr.mxu0 0.0
      %833 = vmatpush1.xpose.msra.mxu0 0.0
      %834 = vmatprep.subr.mxu0 0.0
      %835 = vmatpush1.xpose.msra.mxu0 0.0
      %836 = vmatprep.subr.mxu0 0.0
      %837 = vmatpush1.xpose.msra.mxu0 0.0
      %838 = vmatprep.mubr.f32.mxu0 0.0
      %839 = vmatmul.mubr.f32.gmra.mrb[0].mxu0 %v679
      %v840 = vpop.f32.mrb[0].mxu0
      %v841 = vadd.f32 0.0, %v840
      %v842 = vpop.f32.mrb[0].mxu0
      %843 = vmatprep.mubr.f32.mxu0 0.0
      %844 = vmatmul.mubr.f32.gmra.mrb[0].mxu0 %v682
      %v845 = vpop.f32.mrb[0].mxu0
      %v846 = vadd.f32 0.0, %v845
      %v847 = vpop.f32.mrb[0].mxu0
      %848 = vmatprep.mubr.f32.mxu0 0.0
      %849 = vmatmul.mubr.f32.gmra.mrb[0].mxu0 %v685
      %v850 = vpop.f32.mrb[0].mxu0
      %v851 = vadd.f32 0.0, %v850
      %v852 = vpop.f32.mrb[0].mxu0
      %853 = vmatprep.mubr.f32.mxu0 0.0
      %854 = vmatmul.mubr.f32.gmra.mrb[0].mxu0 %v688
      %v855 = vpop.f32.mrb[0].mxu0
      %v856 = vadd.f32 0.0, %v855
      %v857 = vpop.f32.mrb[0].mxu0
      %858 = vmatprep.mubr.f32.mxu0 0.0
      %859 = vmatmul.mubr.f32.gmra.mrb[0].mxu0 %v691
      %v860 = vpop.f32.mrb[0].mxu0
      %v861 = vadd.f32 0.0, %v860
      %v862 = vpop.f32.mrb[0].mxu0
      %863 = vmatprep.mubr.f32.mxu0 0.0
      %864 = vmatmul.mubr.f32.gmra.mrb[0].mxu0 %v694
      %v865 = vpop.f32.mrb[0].mxu0
      %v866 = vadd.f32 0.0, %v865
      %v867 = vpop.f32.mrb[0].mxu0
      %868 = vmatprep.mubr.f32.mxu0 0.0
      %869 = vmatmul.mubr.f32.gmra.mrb[0].mxu0 %v697
      %v870 = vpop.f32.mrb[0].mxu0
      %v871 = vadd.f32 0.0, %v870
      %v872 = vpop.f32.mrb[0].mxu0
      %873 = vmatprep.mubr.f32.mxu0 0.0
      %874 = vmatmul.mubr.f32.gmra.mrb[0].mxu0 %v700
      %v875 = vpop.f32.mrb[0].mxu0
      %v876 = vadd.f32 0.0, %v875
      %v877 = vpop.f32.mrb[0].mxu0
      %878 = vmatprep.mubr.f32.mxu0 0.0
      %879 = vmatmul.mubr.f32.gmra.mrb[0].mxu0 %v703
      %v880 = vpop.f32.mrb[0].mxu0
      %v881 = vadd.f32 0.0, %v880
      %v882 = vpop.f32.mrb[0].mxu0
      %883 = vmatprep.mubr.f32.mxu0 0.0
      %884 = vmatmul.mubr.f32.gmra.mrb[0].mxu0 %v706
      %v885 = vpop.f32.mrb[0].mxu0
      %v886 = vadd.f32 0.0, %v885
      %v887 = vpop.f32.mrb[0].mxu0
      %888 = vmatprep.mubr.f32.mxu0 0.0
      %889 = vmatmul.mubr.f32.gmra.mrb[0].mxu0 %v709
      %v890 = vpop.f32.mrb[0].mxu0
      %v891 = vadd.f32 0.0, %v890
      %v892 = vpop.f32.mrb[0].mxu0
      %893 = vmatprep.mubr.f32.mxu0 0.0
      %894 = vmatmul.mubr.f32.gmra.mrb[0].mxu0 %v712
      %v895 = vpop.f32.mrb[0].mxu0
      %v896 = vadd.f32 0.0, %v895
      %v897 = vpop.f32.mrb[0].mxu0
      %898 = vmatprep.mubr.f32.mxu0 0.0
      %899 = vmatmul.mubr.f32.gmra.mrb[0].mxu0 %v715
      %v900 = vpop.f32.mrb[0].mxu0
      %v901 = vadd.f32 0.0, %v900
      %v902 = vpop.f32.mrb[0].mxu0
      %903 = vmatprep.mubr.f32.mxu0 0.0
      %904 = vmatmul.mubr.f32.gmra.mrb[0].mxu0 %v718
      %v905 = vpop.f32.mrb[0].mxu0
      %v906 = vadd.f32 0.0, %v905
      %v907 = vpop.f32.mrb[0].mxu0
      %908 = vmatprep.mubr.f32.mxu0 0.0
      %909 = vmatmul.mubr.f32.gmra.mrb[0].mxu0 %v721
      %v910 = vpop.f32.mrb[0].mxu0
      %v911 = vadd.f32 0.0, %v910
      %v912 = vpop.f32.mrb[0].mxu0
      %913 = vmatprep.mubr.f32.mxu0 0.0
      %914 = vmatmul.mubr.f32.gmra.mrb[0].mxu0 %v724
      %v915 = vpop.f32.mrb[0].mxu0
      %v916 = vadd.f32 0.0, %v915
      %v917 = vpop.f32.mrb[0].mxu0
      %918 = vdwg.mxu0
      %v919 = vmax.f32 %v841, 0.0
      %v920 = vmax.f32 %v846, 0.0
      %v921 = vmax.f32 %v851, 0.0
      %v922 = vmax.f32 %v856, 0.0
      %v923 = vmax.f32 %v861, 0.0
      %v924 = vmax.f32 %v866, 0.0
      %v925 = vmax.f32 %v871, 0.0
      %v926 = vmax.f32 %v876, 0.0
      %v927 = vmax.f32 %v881, 0.0
      %v928 = vmax.f32 %v886, 0.0
      %v929 = vmax.f32 %v891, 0.0
      %v930 = vmax.f32 %v896, 0.0
      %v931 = vmax.f32 %v901, 0.0
      %v932 = vmax.f32 %v906, 0.0
      %v933 = vmax.f32 %v911, 0.0
      %v934 = vmax.f32 %v916, 0.0
      %s935 = sld [smem:[#allocation5 + %s349]]
      %p936 = scmp.eq.s32.totalorder %s935, 0
      // Predicated region
      $region41: #{nsa_loss_adapted.3} parent=35 // pred_check
        %p937 = pneg %p936
      $region42: #{nsa_loss_adapted.3} parent=35 // pred_check_branch
        %939 = sbr.rel (%p937) target = $region44
      $region43: #{nsa_loss_adapted.3} parent=35 // pred_region
        %v940 = vmul.f32 %v629, %v919
        %v941 = vmul.f32 %v630, %v920
        %v942 = vmul.f32 %v631, %v921
        %v943 = vmul.f32 %v632, %v922
        %v944 = vmul.f32 %v633, %v923
        %v945 = vmul.f32 %v634, %v924
        %v946 = vmul.f32 %v635, %v925
        %v947 = vmul.f32 %v636, %v926
        %v948 = vmul.f32 %v637, %v927
        %v949 = vmul.f32 %v638, %v928
        %v950 = vmul.f32 %v639, %v929
        %v951 = vmul.f32 %v640, %v930
        %v952 = vmul.f32 %v641, %v931
        %v953 = vmul.f32 %v642, %v932
        %v954 = vmul.f32 %v643, %v933
        %v955 = vmul.f32 %v644, %v934
        %v956 = vrsqrt.pop %v940
        %v957 = vmul.f32 %v940, %v956
        %vm958 = vcmp.eq.f32.partialorder %v940, inf
        %v959 = vsel %vm958, %v940, %v957
        %vm960 = vcmp.eq.f32.partialorder %v940, 0.0
        %v961 = vand.u32 %v940, 2147483648
        %v962 = vsel %vm960, %v961, %v959
        %v963 = vrsqrt.pop %v941
        %v964 = vmul.f32 %v941, %v963
        %vm965 = vcmp.eq.f32.partialorder %v941, inf
        %v966 = vsel %vm965, %v941, %v964
        %vm967 = vcmp.eq.f32.partialorder %v941, 0.0
        %v968 = vand.u32 %v941, 2147483648
        %v969 = vsel %vm967, %v968, %v966
        %v970 = vrsqrt.pop %v942
        %v971 = vmul.f32 %v942, %v970
        %vm972 = vcmp.eq.f32.partialorder %v942, inf
        %v973 = vsel %vm972, %v942, %v971
        %vm974 = vcmp.eq.f32.partialorder %v942, 0.0
        %v975 = vand.u32 %v942, 2147483648
        %v976 = vsel %vm974, %v975, %v973
        %v977 = vrsqrt.pop %v943
        %v978 = vmul.f32 %v943, %v977
        %vm979 = vcmp.eq.f32.partialorder %v943, inf
        %v980 = vsel %vm979, %v943, %v978
        %vm981 = vcmp.eq.f32.partialorder %v943, 0.0
        %v982 = vand.u32 %v943, 2147483648
        %v983 = vsel %vm981, %v982, %v980
        %v984 = vrsqrt.pop %v944
        %v985 = vmul.f32 %v944, %v984
        %vm986 = vcmp.eq.f32.partialorder %v944, inf
        %v987 = vsel %vm986, %v944, %v985
        %vm988 = vcmp.eq.f32.partialorder %v944, 0.0
        %v989 = vand.u32 %v944, 2147483648
        %v990 = vsel %vm988, %v989, %v987
        %v991 = vrsqrt.pop %v945
        %v992 = vmul.f32 %v945, %v991
        %vm993 = vcmp.eq.f32.partialorder %v945, inf
        %v994 = vsel %vm993, %v945, %v992
        %vm995 = vcmp.eq.f32.partialorder %v945, 0.0
        %v996 = vand.u32 %v945, 2147483648
        %v997 = vsel %vm995, %v996, %v994
        %v998 = vrsqrt.pop %v946
        %v999 = vmul.f32 %v946, %v998
        %vm1000 = vcmp.eq.f32.partialorder %v946, inf
        %v1001 = vsel %vm1000, %v946, %v999
        %vm1002 = vcmp.eq.f32.partialorder %v946, 0.0
        %v1003 = vand.u32 %v946, 2147483648
        %v1004 = vsel %vm1002, %v1003, %v1001
        %v1005 = vrsqrt.pop %v947
        %v1006 = vmul.f32 %v947, %v1005
        %vm1007 = vcmp.eq.f32.partialorder %v947, inf
        %v1008 = vsel %vm1007, %v947, %v1006
        %vm1009 = vcmp.eq.f32.partialorder %v947, 0.0
        %v1010 = vand.u32 %v947, 2147483648
        %v1011 = vsel %vm1009, %v1010, %v1008
        %v1012 = vrsqrt.pop %v948
        %v1013 = vmul.f32 %v948, %v1012
        %vm1014 = vcmp.eq.f32.partialorder %v948, inf
        %v1015 = vsel %vm1014, %v948, %v1013
        %vm1016 = vcmp.eq.f32.partialorder %v948, 0.0
        %v1017 = vand.u32 %v948, 2147483648
        %v1018 = vsel %vm1016, %v1017, %v1015
        %v1019 = vrsqrt.pop %v949
        %v1020 = vmul.f32 %v949, %v1019
        %vm1021 = vcmp.eq.f32.partialorder %v949, inf
        %v1022 = vsel %vm1021, %v949, %v1020
        %vm1023 = vcmp.eq.f32.partialorder %v949, 0.0
        %v1024 = vand.u32 %v949, 2147483648
        %v1025 = vsel %vm1023, %v1024, %v1022
        %v1026 = vrsqrt.pop %v950
        %v1027 = vmul.f32 %v950, %v1026
        %vm1028 = vcmp.eq.f32.partialorder %v950, inf
        %v1029 = vsel %vm1028, %v950, %v1027
        %vm1030 = vcmp.eq.f32.partialorder %v950, 0.0
        %v1031 = vand.u32 %v950, 2147483648
        %v1032 = vsel %vm1030, %v1031, %v1029
        %v1033 = vrsqrt.pop %v951
        %v1034 = vmul.f32 %v951, %v1033
        %vm1035 = vcmp.eq.f32.partialorder %v951, inf
        %v1036 = vsel %vm1035, %v951, %v1034
        %vm1037 = vcmp.eq.f32.partialorder %v951, 0.0
        %v1038 = vand.u32 %v951, 2147483648
        %v1039 = vsel %vm1037, %v1038, %v1036
        %v1040 = vrsqrt.pop %v952
        %v1041 = vmul.f32 %v952, %v1040
        %vm1042 = vcmp.eq.f32.partialorder %v952, inf
        %v1043 = vsel %vm1042, %v952, %v1041
        %vm1044 = vcmp.eq.f32.partialorder %v952, 0.0
        %v1045 = vand.u32 %v952, 2147483648
        %v1046 = vsel %vm1044, %v1045, %v1043
        %v1047 = vrsqrt.pop %v953
        %v1048 = vmul.f32 %v953, %v1047
        %vm1049 = vcmp.eq.f32.partialorder %v953, inf
        %v1050 = vsel %vm1049, %v953, %v1048
        %vm1051 = vcmp.eq.f32.partialorder %v953, 0.0
        %v1052 = vand.u32 %v953, 2147483648
        %v1053 = vsel %vm1051, %v1052, %v1050
        %v1054 = vrsqrt.pop %v954
        %v1055 = vmul.f32 %v954, %v1054
        %vm1056 = vcmp.eq.f32.partialorder %v954, inf
        %v1057 = vsel %vm1056, %v954, %v1055
        %vm1058 = vcmp.eq.f32.partialorder %v954, 0.0
        %v1059 = vand.u32 %v954, 2147483648
        %v1060 = vsel %vm1058, %v1059, %v1057
        %v1061 = vrsqrt.pop %v955
        %v1062 = vmul.f32 %v955, %v1061
        %vm1063 = vcmp.eq.f32.partialorder %v955, inf
        %v1064 = vsel %vm1063, %v955, %v1062
        %vm1065 = vcmp.eq.f32.partialorder %v955, 0.0
        %v1066 = vand.u32 %v955, 2147483648
        %v1067 = vsel %vm1065, %v1066, %v1064
        %v1068 = vld [vmem:[%s348] sm:$0x1]
        %v1069 = vadd.f32 %v629, %v630
        %v1070 = vadd.f32 %v1069, %v631
        %v1071 = vadd.f32 %v1070, %v632
        %v1072 = vadd.f32 %v1071, %v633
        %v1073 = vadd.f32 %v1072, %v634
        %v1074 = vadd.f32 %v1073, %v635
        %v1075 = vadd.f32 %v1074, %v636
        %v1076 = vadd.f32 %v1075, %v637
        %v1077 = vadd.f32 %v1076, %v638
        %v1078 = vadd.f32 %v1077, %v639
        %v1079 = vadd.f32 %v1078, %v640
        %v1080 = vadd.f32 %v1079, %v641
        %v1081 = vadd.f32 %v1080, %v642
        %v1082 = vadd.f32 %v1081, %v643
        %v1083 = vadd.f32 %v1082, %v644
        %v1084 = vrot.slane %v1083, 4
        %v1085 = vadd.f32 %v1083, %v1084
        %v1086 = vrot.slane %v1085, 2
        %v1087 = vadd.f32 %v1085, %v1086
        %v1088 = vrot.slane %v1087, 1
        %v1089 = vadd.f32 %v1087, %v1088
        %v1090 = vadd.f32 %v1068, %v1089
        %1091 = vst [vmem:[%s348] sm:$0x1] %v1090
        %v1092 = vld [vmem:[%s348 + $0x1] sm:$0x1]
        %v1093 = vadd.f32 %v919, %v920
        %v1094 = vadd.f32 %v1093, %v921
        %v1095 = vadd.f32 %v1094, %v922
        %v1096 = vadd.f32 %v1095, %v923
        %v1097 = vadd.f32 %v1096, %v924
        %v1098 = vadd.f32 %v1097, %v925
        %v1099 = vadd.f32 %v1098, %v926
        %v1100 = vadd.f32 %v1099, %v927
        %v1101 = vadd.f32 %v1100, %v928
        %v1102 = vadd.f32 %v1101, %v929
        %v1103 = vadd.f32 %v1102, %v930
        %v1104 = vadd.f32 %v1103, %v931
        %v1105 = vadd.f32 %v1104, %v932
        %v1106 = vadd.f32 %v1105, %v933
        %v1107 = vadd.f32 %v1106, %v934
        %v1108 = vrot.slane %v1107, 4
        %v1109 = vadd.f32 %v1107, %v1108
        %v1110 = vrot.slane %v1109, 2
        %v1111 = vadd.f32 %v1109, %v1110
        %v1112 = vrot.slane %v1111, 1
        %v1113 = vadd.f32 %v1111, %v1112
        %v1114 = vadd.f32 %v1092, %v1113
        %1115 = vst [vmem:[%s348 + $0x1] sm:$0x1] %v1114
        %v1116 = vld [vmem:[%s348 + $0x2] sm:$0x1]
        %v1117 = vadd.f32 %v962, %v969
        %v1118 = vadd.f32 %v1117, %v976
        %v1119 = vadd.f32 %v1118, %v983
        %v1120 = vadd.f32 %v1119, %v990
        %v1121 = vadd.f32 %v1120, %v997
        %v1122 = vadd.f32 %v1121, %v1004
        %v1123 = vadd.f32 %v1122, %v1011
        %v1124 = vadd.f32 %v1123, %v1018
        %v1125 = vadd.f32 %v1124, %v1025
        %v1126 = vadd.f32 %v1125, %v1032
        %v1127 = vadd.f32 %v1126, %v1039
        %v1128 = vadd.f32 %v1127, %v1046
        %v1129 = vadd.f32 %v1128, %v1053
        %v1130 = vadd.f32 %v1129, %v1060
        %v1131 = vadd.f32 %v1130, %v1067
        %v1132 = vrot.slane %v1131, 4
        %v1133 = vadd.f32 %v1131, %v1132
        %v1134 = vrot.slane %v1133, 2
        %v1135 = vadd.f32 %v1133, %v1134
        %v1136 = vrot.slane %v1135, 1
        %v1137 = vadd.f32 %v1135, %v1136
        %v1138 = vadd.f32 %v1116, %v1137
        %1139 = vst [vmem:[%s348 + $0x2] sm:$0x1] %v1138
      $region44: #{nsa_loss_adapted.3} parent=35 // pred_fallthru
        _
      %p1140 = scmp.eq.s32.totalorder %s935, 1
      // Predicated region
      $region45: #{nsa_loss_adapted.3} parent=35 // pred_check
        %p1141 = pneg %p1140
      $region46: #{nsa_loss_adapted.3} parent=35 // pred_check_branch
        %1143 = sbr.rel (%p1141) target = $region48
      $region47: #{nsa_loss_adapted.3} parent=35 // pred_region
        %s1144 = sld [smem:[#allocation3 + %s349]]
        %s1145 = sld [smem:[#allocation4 + %s349]]
        %s1146 = smul.u32 %s1144, 128
        %v1147 = vlaneseq
        %v1148 = vshrl.u32 %v1147, 7
        %v1149 = vadd.s32 %v1148, 8
        %v1150 = vadd.s32 %v1148, 16
        %v1151 = vadd.s32 %v1148, 24
        %v1152 = vadd.s32 %v1148, 32
        %v1153 = vadd.s32 %v1148, 40
        %v1154 = vadd.s32 %v1148, 48
        %v1155 = vadd.s32 %v1148, 56
        %v1156 = vadd.s32 %v1148, 64
        %v1157 = vadd.s32 %v1148, 72
        %v1158 = vadd.s32 %v1148, 80
        %v1159 = vadd.s32 %v1148, 88
        %v1160 = vadd.s32 %v1148, 96
        %v1161 = vadd.s32 %v1148, 104
        %v1162 = vadd.s32 %v1148, 112
        %v1163 = vadd.s32 %v1148, 120
        %v1164 = vstv %s1146
        %v1165 = vadd.s32 %v1164, %v1148
        %v1166 = vadd.s32 %v1164, %v1149
        %v1167 = vadd.s32 %v1164, %v1150
        %v1168 = vadd.s32 %v1164, %v1151
        %v1169 = vadd.s32 %v1164, %v1152
        %v1170 = vadd.s32 %v1164, %v1153
        %v1171 = vadd.s32 %v1164, %v1154
        %v1172 = vadd.s32 %v1164, %v1155
        %v1173 = vadd.s32 %v1164, %v1156
        %v1174 = vadd.s32 %v1164, %v1157
        %v1175 = vadd.s32 %v1164, %v1158
        %v1176 = vadd.s32 %v1164, %v1159
        %v1177 = vadd.s32 %v1164, %v1160
        %v1178 = vadd.s32 %v1164, %v1161
        %v1179 = vadd.s32 %v1164, %v1162
        %v1180 = vadd.s32 %v1164, %v1163
        %s1181 = smul.u32 %s1145, 128
        %v1182 = vlaneseq
        %v1183 = vand.u32 %v1182, 127
        %v1184 = vstv %s1181
        %v1185 = vadd.s32 %v1184, %v1183
        %vm1186 = vcmp.gt.s32.totalorder %v1185, %v1165
        %vm1187 = vcmp.gt.s32.totalorder %v1185, %v1166
        %vm1188 = vcmp.gt.s32.totalorder %v1185, %v1167
        %vm1189 = vcmp.gt.s32.totalorder %v1185, %v1168
        %vm1190 = vcmp.gt.s32.totalorder %v1185, %v1169
        %vm1191 = vcmp.gt.s32.totalorder %v1185, %v1170
        %vm1192 = vcmp.gt.s32.totalorder %v1185, %v1171
        %vm1193 = vcmp.gt.s32.totalorder %v1185, %v1172
        %vm1194 = vcmp.gt.s32.totalorder %v1185, %v1173
        %vm1195 = vcmp.gt.s32.totalorder %v1185, %v1174
        %vm1196 = vcmp.gt.s32.totalorder %v1185, %v1175
        %vm1197 = vcmp.gt.s32.totalorder %v1185, %v1176
        %vm1198 = vcmp.gt.s32.totalorder %v1185, %v1177
        %vm1199 = vcmp.gt.s32.totalorder %v1185, %v1178
        %vm1200 = vcmp.gt.s32.totalorder %v1185, %v1179
        %vm1201 = vcmp.gt.s32.totalorder %v1185, %v1180
        %vm1202 = vcmp.lt.s32.totalorder %v1185, 8
        %vm1203 = vmand %vm1186, %vm1202
        %vm1204 = vmand %vm1187, %vm1202
        %vm1205 = vmand %vm1188, %vm1202
        %vm1206 = vmand %vm1189, %vm1202
        %vm1207 = vmand %vm1190, %vm1202
        %vm1208 = vmand %vm1191, %vm1202
        %vm1209 = vmand %vm1192, %vm1202
        %vm1210 = vmand %vm1193, %vm1202
        %vm1211 = vmand %vm1194, %vm1202
        %vm1212 = vmand %vm1195, %vm1202
        %vm1213 = vmand %vm1196, %vm1202
        %vm1214 = vmand %vm1197, %vm1202
        %vm1215 = vmand %vm1198, %vm1202
        %vm1216 = vmand %vm1199, %vm1202
        %vm1217 = vmand %vm1200, %vm1202
        %vm1218 = vmand %vm1201, %vm1202
        %v1219 = vsel %vm1203, %v629, 0.0
        %v1220 = vsel %vm1204, %v630, 0.0
        %v1221 = vsel %vm1205, %v631, 0.0
        %v1222 = vsel %vm1206, %v632, 0.0
        %v1223 = vsel %vm1207, %v633, 0.0
        %v1224 = vsel %vm1208, %v634, 0.0
        %v1225 = vsel %vm1209, %v635, 0.0
        %v1226 = vsel %vm1210, %v636, 0.0
        %v1227 = vsel %vm1211, %v637, 0.0
        %v1228 = vsel %vm1212, %v638, 0.0
        %v1229 = vsel %vm1213, %v639, 0.0
        %v1230 = vsel %vm1214, %v640, 0.0
        %v1231 = vsel %vm1215, %v641, 0.0
        %v1232 = vsel %vm1216, %v642, 0.0
        %v1233 = vsel %vm1217, %v643, 0.0
        %v1234 = vsel %vm1218, %v644, 0.0
        %v1235 = vsel %vm1203, %v919, 0.0
        %v1236 = vsel %vm1204, %v920, 0.0
        %v1237 = vsel %vm1205, %v921, 0.0
        %v1238 = vsel %vm1206, %v922, 0.0
        %v1239 = vsel %vm1207, %v923, 0.0
        %v1240 = vsel %vm1208, %v924, 0.0
        %v1241 = vsel %vm1209, %v925, 0.0
        %v1242 = vsel %vm1210, %v926, 0.0
        %v1243 = vsel %vm1211, %v927, 0.0
        %v1244 = vsel %vm1212, %v928, 0.0
        %v1245 = vsel %vm1213, %v929, 0.0
        %v1246 = vsel %vm1214, %v930, 0.0
        %v1247 = vsel %vm1215, %v931, 0.0
        %v1248 = vsel %vm1216, %v932, 0.0
        %v1249 = vsel %vm1217, %v933, 0.0
        %v1250 = vsel %vm1218, %v934, 0.0
        %v1251 = vmul.f32 %v1219, %v1235
        %v1252 = vmul.f32 %v1220, %v1236
        %v1253 = vmul.f32 %v1221, %v1237
        %v1254 = vmul.f32 %v1222, %v1238
        %v1255 = vmul.f32 %v1223, %v1239
        %v1256 = vmul.f32 %v1224, %v1240
        %v1257 = vmul.f32 %v1225, %v1241
        %v1258 = vmul.f32 %v1226, %v1242
        %v1259 = vmul.f32 %v1227, %v1243
        %v1260 = vmul.f32 %v1228, %v1244
        %v1261 = vmul.f32 %v1229, %v1245
        %v1262 = vmul.f32 %v1230, %v1246
        %v1263 = vmul.f32 %v1231, %v1247
        %v1264 = vmul.f32 %v1232, %v1248
        %v1265 = vmul.f32 %v1233, %v1249
        %v1266 = vmul.f32 %v1234, %v1250
        %v1267 = vrsqrt.pop %v1251
        %v1268 = vmul.f32 %v1251, %v1267
        %vm1269 = vcmp.eq.f32.partialorder %v1251, inf
        %v1270 = vsel %vm1269, %v1251, %v1268
        %vm1271 = vcmp.eq.f32.partialorder %v1251, 0.0
        %v1272 = vand.u32 %v1251, 2147483648
        %v1273 = vsel %vm1271, %v1272, %v1270
        %v1274 = vrsqrt.pop %v1252
        %v1275 = vmul.f32 %v1252, %v1274
        %vm1276 = vcmp.eq.f32.partialorder %v1252, inf
        %v1277 = vsel %vm1276, %v1252, %v1275
        %vm1278 = vcmp.eq.f32.partialorder %v1252, 0.0
        %v1279 = vand.u32 %v1252, 2147483648
        %v1280 = vsel %vm1278, %v1279, %v1277
        %v1281 = vrsqrt.pop %v1253
        %v1282 = vmul.f32 %v1253, %v1281
        %vm1283 = vcmp.eq.f32.partialorder %v1253, inf
        %v1284 = vsel %vm1283, %v1253, %v1282
        %vm1285 = vcmp.eq.f32.partialorder %v1253, 0.0
        %v1286 = vand.u32 %v1253, 2147483648
        %v1287 = vsel %vm1285, %v1286, %v1284
        %v1288 = vrsqrt.pop %v1254
        %v1289 = vmul.f32 %v1254, %v1288
        %vm1290 = vcmp.eq.f32.partialorder %v1254, inf
        %v1291 = vsel %vm1290, %v1254, %v1289
        %vm1292 = vcmp.eq.f32.partialorder %v1254, 0.0
        %v1293 = vand.u32 %v1254, 2147483648
        %v1294 = vsel %vm1292, %v1293, %v1291
        %v1295 = vrsqrt.pop %v1255
        %v1296 = vmul.f32 %v1255, %v1295
        %vm1297 = vcmp.eq.f32.partialorder %v1255, inf
        %v1298 = vsel %vm1297, %v1255, %v1296
        %vm1299 = vcmp.eq.f32.partialorder %v1255, 0.0
        %v1300 = vand.u32 %v1255, 2147483648
        %v1301 = vsel %vm1299, %v1300, %v1298
        %v1302 = vrsqrt.pop %v1256
        %v1303 = vmul.f32 %v1256, %v1302
        %vm1304 = vcmp.eq.f32.partialorder %v1256, inf
        %v1305 = vsel %vm1304, %v1256, %v1303
        %vm1306 = vcmp.eq.f32.partialorder %v1256, 0.0
        %v1307 = vand.u32 %v1256, 2147483648
        %v1308 = vsel %vm1306, %v1307, %v1305
        %v1309 = vrsqrt.pop %v1257
        %v1310 = vmul.f32 %v1257, %v1309
        %vm1311 = vcmp.eq.f32.partialorder %v1257, inf
        %v1312 = vsel %vm1311, %v1257, %v1310
        %vm1313 = vcmp.eq.f32.partialorder %v1257, 0.0
        %v1314 = vand.u32 %v1257, 2147483648
        %v1315 = vsel %vm1313, %v1314, %v1312
        %v1316 = vrsqrt.pop %v1258
        %v1317 = vmul.f32 %v1258, %v1316
        %vm1318 = vcmp.eq.f32.partialorder %v1258, inf
        %v1319 = vsel %vm1318, %v1258, %v1317
        %vm1320 = vcmp.eq.f32.partialorder %v1258, 0.0
        %v1321 = vand.u32 %v1258, 2147483648
        %v1322 = vsel %vm1320, %v1321, %v1319
        %v1323 = vrsqrt.pop %v1259
        %v1324 = vmul.f32 %v1259, %v1323
        %vm1325 = vcmp.eq.f32.partialorder %v1259, inf
        %v1326 = vsel %vm1325, %v1259, %v1324
        %vm1327 = vcmp.eq.f32.partialorder %v1259, 0.0
        %v1328 = vand.u32 %v1259, 2147483648
        %v1329 = vsel %vm1327, %v1328, %v1326
        %v1330 = vrsqrt.pop %v1260
        %v1331 = vmul.f32 %v1260, %v1330
        %vm1332 = vcmp.eq.f32.partialorder %v1260, inf
        %v1333 = vsel %vm1332, %v1260, %v1331
        %vm1334 = vcmp.eq.f32.partialorder %v1260, 0.0
        %v1335 = vand.u32 %v1260, 2147483648
        %v1336 = vsel %vm1334, %v1335, %v1333
        %v1337 = vrsqrt.pop %v1261
        %v1338 = vmul.f32 %v1261, %v1337
        %vm1339 = vcmp.eq.f32.partialorder %v1261, inf
        %v1340 = vsel %vm1339, %v1261, %v1338
        %vm1341 = vcmp.eq.f32.partialorder %v1261, 0.0
        %v1342 = vand.u32 %v1261, 2147483648
        %v1343 = vsel %vm1341, %v1342, %v1340
        %v1344 = vrsqrt.pop %v1262
        %v1345 = vmul.f32 %v1262, %v1344
        %vm1346 = vcmp.eq.f32.partialorder %v1262, inf
        %v1347 = vsel %vm1346, %v1262, %v1345
        %vm1348 = vcmp.eq.f32.partialorder %v1262, 0.0
        %v1349 = vand.u32 %v1262, 2147483648
        %v1350 = vsel %vm1348, %v1349, %v1347
        %v1351 = vrsqrt.pop %v1263
        %v1352 = vmul.f32 %v1263, %v1351
        %vm1353 = vcmp.eq.f32.partialorder %v1263, inf
        %v1354 = vsel %vm1353, %v1263, %v1352
        %vm1355 = vcmp.eq.f32.partialorder %v1263, 0.0
        %v1356 = vand.u32 %v1263, 2147483648
        %v1357 = vsel %vm1355, %v1356, %v1354
        %v1358 = vrsqrt.pop %v1264
        %v1359 = vmul.f32 %v1264, %v1358
        %vm1360 = vcmp.eq.f32.partialorder %v1264, inf
        %v1361 = vsel %vm1360, %v1264, %v1359
        %vm1362 = vcmp.eq.f32.partialorder %v1264, 0.0
        %v1363 = vand.u32 %v1264, 2147483648
        %v1364 = vsel %vm1362, %v1363, %v1361
        %v1365 = vrsqrt.pop %v1265
        %v1366 = vmul.f32 %v1265, %v1365
        %vm1367 = vcmp.eq.f32.partialorder %v1265, inf
        %v1368 = vsel %vm1367, %v1265, %v1366
        %vm1369 = vcmp.eq.f32.partialorder %v1265, 0.0
        %v1370 = vand.u32 %v1265, 2147483648
        %v1371 = vsel %vm1369, %v1370, %v1368
        %v1372 = vrsqrt.pop %v1266
        %v1373 = vmul.f32 %v1266, %v1372
        %vm1374 = vcmp.eq.f32.partialorder %v1266, inf
        %v1375 = vsel %vm1374, %v1266, %v1373
        %vm1376 = vcmp.eq.f32.partialorder %v1266, 0.0
        %v1377 = vand.u32 %v1266, 2147483648
        %v1378 = vsel %vm1376, %v1377, %v1375
        %v1379 = vld [vmem:[%s348] sm:$0x1]
        %v1380 = vadd.f32 %v1219, %v1220
        %v1381 = vadd.f32 %v1380, %v1221
        %v1382 = vadd.f32 %v1381, %v1222
        %v1383 = vadd.f32 %v1382, %v1223
        %v1384 = vadd.f32 %v1383, %v1224
        %v1385 = vadd.f32 %v1384, %v1225
        %v1386 = vadd.f32 %v1385, %v1226
        %v1387 = vadd.f32 %v1386, %v1227
        %v1388 = vadd.f32 %v1387, %v1228
        %v1389 = vadd.f32 %v1388, %v1229
        %v1390 = vadd.f32 %v1389, %v1230
        %v1391 = vadd.f32 %v1390, %v1231
        %v1392 = vadd.f32 %v1391, %v1232
        %v1393 = vadd.f32 %v1392, %v1233
        %v1394 = vadd.f32 %v1393, %v1234
        %v1395 = vrot.slane %v1394, 4
        %v1396 = vadd.f32 %v1394, %v1395
        %v1397 = vrot.slane %v1396, 2
        %v1398 = vadd.f32 %v1396, %v1397
        %v1399 = vrot.slane %v1398, 1
        %v1400 = vadd.f32 %v1398, %v1399
        %v1401 = vadd.f32 %v1379, %v1400
        %1402 = vst [vmem:[%s348] sm:$0x1] %v1401
        %v1403 = vld [vmem:[%s348 + $0x1] sm:$0x1]
        %v1404 = vadd.f32 %v1235, %v1236
        %v1405 = vadd.f32 %v1404, %v1237
        %v1406 = vadd.f32 %v1405, %v1238
        %v1407 = vadd.f32 %v1406, %v1239
        %v1408 = vadd.f32 %v1407, %v1240
        %v1409 = vadd.f32 %v1408, %v1241
        %v1410 = vadd.f32 %v1409, %v1242
        %v1411 = vadd.f32 %v1410, %v1243
        %v1412 = vadd.f32 %v1411, %v1244
        %v1413 = vadd.f32 %v1412, %v1245
        %v1414 = vadd.f32 %v1413, %v1246
        %v1415 = vadd.f32 %v1414, %v1247
        %v1416 = vadd.f32 %v1415, %v1248
        %v1417 = vadd.f32 %v1416, %v1249
        %v1418 = vadd.f32 %v1417, %v1250
        %v1419 = vrot.slane %v1418, 4
        %v1420 = vadd.f32 %v1418, %v1419
        %v1421 = vrot.slane %v1420, 2
        %v1422 = vadd.f32 %v1420, %v1421
        %v1423 = vrot.slane %v1422, 1
        %v1424 = vadd.f32 %v1422, %v1423
        %v1425 = vadd.f32 %v1403, %v1424
        %1426 = vst [vmem:[%s348 + $0x1] sm:$0x1] %v1425
        %v1427 = vld [vmem:[%s348 + $0x2] sm:$0x1]
        %v1428 = vadd.f32 %v1273, %v1280
        %v1429 = vadd.f32 %v1428, %v1287
        %v1430 = vadd.f32 %v1429, %v1294
        %v1431 = vadd.f32 %v1430, %v1301
        %v1432 = vadd.f32 %v1431, %v1308
        %v1433 = vadd.f32 %v1432, %v1315
        %v1434 = vadd.f32 %v1433, %v1322
        %v1435 = vadd.f32 %v1434, %v1329
        %v1436 = vadd.f32 %v1435, %v1336
        %v1437 = vadd.f32 %v1436, %v1343
        %v1438 = vadd.f32 %v1437, %v1350
        %v1439 = vadd.f32 %v1438, %v1357
        %v1440 = vadd.f32 %v1439, %v1364
        %v1441 = vadd.f32 %v1440, %v1371
        %v1442 = vadd.f32 %v1441, %v1378
        %v1443 = vrot.slane %v1442, 4
        %v1444 = vadd.f32 %v1442, %v1443
        %v1445 = vrot.slane %v1444, 2
        %v1446 = vadd.f32 %v1444, %v1445
        %v1447 = vrot.slane %v1446, 1
        %v1448 = vadd.f32 %v1446, %v1447
        %v1449 = vadd.f32 %v1427, %v1448
        %1450 = vst [vmem:[%s348 + $0x2] sm:$0x1] %v1449
      $region48: #{nsa_loss_adapted.3} parent=35 // pred_fallthru
        _
      %p1451 = scmp.lt.s32.totalorder %s36, 1
      %s1452 = scalar_select %p1451, %s36, 1
      %s1453 = smul.addr %s1452, 8
      %s1454 = scalar_lea.vmem %s7, %s1453
      // Predicated region
      $region49: #{nsa_loss_adapted.3} parent=35 // pred_check
        %p1455 = pneg %p182
      $region50: #{nsa_loss_adapted.3} parent=35 // pred_check_branch
        %1457 = sbr.rel (%p1455) target = $region52
      $region51: #{nsa_loss_adapted.3} parent=35 // pred_region
        _
      $region52: #{nsa_loss_adapted.3} parent=35 // pred_fallthru
        _
    $region36: #{nsa_loss_adapted.3} parent=5 // pred_fallthru
      _
    %p1458 = scmp.le.s32.totalorder 2, %s27
    // Predicated region
    $region53: #{nsa_loss_adapted.3} parent=5 // pred_check
      %p1459 = pneg %p1458
    $region54: #{nsa_loss_adapted.3} parent=5 // pred_check_branch
      %1461 = sbr.rel (%p1459) target = $region56
    $region55: #{nsa_loss_adapted.3} parent=5 // pred_region
      %s1462 = ssub.s32 %s27, 2
      // Predicated region
      $region57: #{nsa_loss_adapted.3} parent=55 // pred_check
        %p1463 = pneg %p188
      $region58: #{nsa_loss_adapted.3} parent=55 // pred_check_branch
        %1465 = sbr.rel (%p1463) target = $region60
      $region59: #{nsa_loss_adapted.3} parent=55 // pred_region
        %p1466 = scmp.lt.s32.totalorder %s38, 1
        %s1467 = scalar_select %p1466, %s38, 1
        %s1468 = smul.addr %s1467, 8
        %s1469 = scalar_lea.vmem %s7, %s1468
      $region60: #{nsa_loss_adapted.3} parent=55 // pred_fallthru
        _
    $region56: #{nsa_loss_adapted.3} parent=5 // pred_fallthru
      _
  $region6: #{nsa_loss_adapted.3} parent=0 // loop_footer
    %s31 = sadd.s32 1, %s27
  $region7: #{nsa_loss_adapted.3} parent=0 // loop_footer_branch
    %26 = sbr.rel target = $region3
  $region8: #{nsa_loss_adapted.3} parent=0 // loop_exit
    _

// kernel: nsa_loss_adapted.2
$region0: #{nsa_loss_adapted.2}
  #allocation0 [shape = 'u32[]', space=smem, size = 0x4, offset = 0x4, fixed_abs, tag = 'smem constant byte address 0x4 - core index']
  #allocation1 [shape = 'u32[144,128]{1,0:T(1,128)}', space=vmem, size = 0x12000, scoped, tag = 'internal scratch']
  %s0 = inlined_call_operand.vmem [shape: f32[128,32], index: 0, kind: input, shape index: {}]
  %s1 = inlined_call_operand.vmem [shape: f32[128,16], index: 1, kind: input, shape index: {}]
  %s2 = inlined_call_operand.vmem [shape: f32[1,32], index: 2, kind: input, shape index: {}]
  %s3 = inlined_call_operand.vmem [shape: f32[1,16], index: 3, kind: input, shape index: {}]
  %s4 = inlined_call_operand.vmem [shape: f32[128,34], index: 4, kind: output, shape index: {0}]
  %s5 = inlined_call_operand.vmem [shape: f32[128,34], index: 5, kind: output, shape index: {1}]
  %s6 = inlined_call_operand.vmem [shape: f32[128,18], index: 6, kind: output, shape index: {2}]
  %s7 = inlined_call_operand.vmem [shape: f32[128,18], index: 7, kind: output, shape index: {3}]
  %s8 = inlined_call_operand.vmem [shape: f32[128,1], index: 8, kind: output, shape index: {4}]
  %s9 = inlined_call_operand.vmem [shape: f32[128,1], index: 9, kind: output, shape index: {5}]
  %10 = xla_tuple %s4, %s5, %s6, %s7, %s8, %s9
  %s11 = sld [smem:[#allocation0]]
  $region66: #{nsa_loss_adapted.2} parent=0
    _
  %s13 = ssub.s32 1, %s11
  %s14 = scalar_select 0, %s13, %s11
  // Predicated region
  $region2: #{nsa_loss_adapted.2} parent=0 // pred_check
    _
  $region3: #{nsa_loss_adapted.2} parent=0 // pred_check_branch
    %16 = sbr.rel (0) target = $region5
  $region4: #{nsa_loss_adapted.2} parent=0 // pred_region
    _
  $region5: #{nsa_loss_adapted.2} parent=0 // pred_fallthru
    _
  // Predicated region
  $region6: #{nsa_loss_adapted.2} parent=0 // pred_check
    _
  $region7: #{nsa_loss_adapted.2} parent=0 // pred_check_branch
    %18 = sbr.rel (0) target = $region9
  $region8: #{nsa_loss_adapted.2} parent=0 // pred_region
    _
  $region9: #{nsa_loss_adapted.2} parent=0 // pred_fallthru
    _
  // Predicated region
  $region10: #{nsa_loss_adapted.2} parent=0 // pred_check
    _
  $region11: #{nsa_loss_adapted.2} parent=0 // pred_check_branch
    %20 = sbr.rel (0) target = $region13
  $region12: #{nsa_loss_adapted.2} parent=0 // pred_region
    _
  $region13: #{nsa_loss_adapted.2} parent=0 // pred_fallthru
    _
  // Predicated region
  $region14: #{nsa_loss_adapted.2} parent=0 // pred_check
    _
  $region15: #{nsa_loss_adapted.2} parent=0 // pred_check_branch
    %22 = sbr.rel (0) target = $region17
  $region16: #{nsa_loss_adapted.2} parent=0 // pred_region
    _
  $region17: #{nsa_loss_adapted.2} parent=0 // pred_fallthru
    _
  %v23 = vld [vmem:[%s0] sm:$0xff]
  %v24 = vld [vmem:[%s0 + $0x8] sm:$0xff]
  %v25 = vld [vmem:[%s0 + $0x10] sm:$0xff]
  %v26 = vld [vmem:[%s0 + $0x18] sm:$0xff]
  %v27 = vld [vmem:[%s0 + $0x20] sm:$0xff]
  %v28 = vld [vmem:[%s0 + $0x28] sm:$0xff]
  %v29 = vld [vmem:[%s0 + $0x30] sm:$0xff]
  %v30 = vld [vmem:[%s0 + $0x38] sm:$0xff]
  %v31 = vld [vmem:[%s0 + $0x40] sm:$0xff]
  %v32 = vld [vmem:[%s0 + $0x48] sm:$0xff]
  %v33 = vld [vmem:[%s0 + $0x50] sm:$0xff]
  %v34 = vld [vmem:[%s0 + $0x58] sm:$0xff]
  %v35 = vld [vmem:[%s0 + $0x60] sm:$0xff]
  %v36 = vld [vmem:[%s0 + $0x68] sm:$0xff]
  %v37 = vld [vmem:[%s0 + $0x70] sm:$0xff]
  %v38 = vld [vmem:[%s0 + $0x78] sm:$0xff]
  %v39 = vld [vmem:[%s1] sm:$0xff]
  %v40 = vld [vmem:[%s1 + $0x8] sm:$0xff]
  %v41 = vld [vmem:[%s1 + $0x10] sm:$0xff]
  %v42 = vld [vmem:[%s1 + $0x18] sm:$0xff]
  %v43 = vld [vmem:[%s1 + $0x20] sm:$0xff]
  %v44 = vld [vmem:[%s1 + $0x28] sm:$0xff]
  %v45 = vld [vmem:[%s1 + $0x30] sm:$0xff]
  %v46 = vld [vmem:[%s1 + $0x38] sm:$0xff]
  %v47 = vld [vmem:[%s1 + $0x40] sm:$0xff]
  %v48 = vld [vmem:[%s1 + $0x48] sm:$0xff]
  %v49 = vld [vmem:[%s1 + $0x50] sm:$0xff]
  %v50 = vld [vmem:[%s1 + $0x58] sm:$0xff]
  %v51 = vld [vmem:[%s1 + $0x60] sm:$0xff]
  %v52 = vld [vmem:[%s1 + $0x68] sm:$0xff]
  %v53 = vld [vmem:[%s1 + $0x70] sm:$0xff]
  %v54 = vld [vmem:[%s1 + $0x78] sm:$0xff]
  %v55 = vld [vmem:[%s2] sm:$0x1]
  %v56 = vld [vmem:[%s3] sm:$0x1]
  %v57 = vmul.f32 %v23, %v23
  %v58 = vmul.f32 %v24, %v24
  %v59 = vmul.f32 %v25, %v25
  %v60 = vmul.f32 %v26, %v26
  %v61 = vmul.f32 %v27, %v27
  %v62 = vmul.f32 %v28, %v28
  %v63 = vmul.f32 %v29, %v29
  %v64 = vmul.f32 %v30, %v30
  %v65 = vmul.f32 %v31, %v31
  %v66 = vmul.f32 %v32, %v32
  %v67 = vmul.f32 %v33, %v33
  %v68 = vmul.f32 %v34, %v34
  %v69 = vmul.f32 %v35, %v35
  %v70 = vmul.f32 %v36, %v36
  %v71 = vmul.f32 %v37, %v37
  %v72 = vmul.f32 %v38, %v38
  %vm73 = vcmask 261120
  %v74 = vsel %vm73, %v57, 0.0
  %75 = vadd.xlane.f32.xlu0 %v74
  %v76 = vpop.xlane.xlu0 %75
  %v77 = vsel %vm73, %v58, 0.0
  %78 = vadd.xlane.f32.xlu0 %v77
  %v79 = vpop.xlane.xlu0 %78
  %v80 = vsel %vm73, %v59, 0.0
  %81 = vadd.xlane.f32.xlu0 %v80
  %v82 = vpop.xlane.xlu0 %81
  %v83 = vsel %vm73, %v60, 0.0
  %84 = vadd.xlane.f32.xlu0 %v83
  %v85 = vpop.xlane.xlu0 %84
  %v86 = vsel %vm73, %v61, 0.0
  %87 = vadd.xlane.f32.xlu0 %v86
  %v88 = vpop.xlane.xlu0 %87
  %v89 = vsel %vm73, %v62, 0.0
  %90 = vadd.xlane.f32.xlu0 %v89
  %v91 = vpop.xlane.xlu0 %90
  %v92 = vsel %vm73, %v63, 0.0
  %93 = vadd.xlane.f32.xlu0 %v92
  %v94 = vpop.xlane.xlu0 %93
  %v95 = vsel %vm73, %v64, 0.0
  %96 = vadd.xlane.f32.xlu0 %v95
  %v97 = vpop.xlane.xlu0 %96
  %v98 = vsel %vm73, %v65, 0.0
  %99 = vadd.xlane.f32.xlu0 %v98
  %v100 = vpop.xlane.xlu0 %99
  %v101 = vsel %vm73, %v66, 0.0
  %102 = vadd.xlane.f32.xlu0 %v101
  %v103 = vpop.xlane.xlu0 %102
  %v104 = vsel %vm73, %v67, 0.0
  %105 = vadd.xlane.f32.xlu0 %v104
  %v106 = vpop.xlane.xlu0 %105
  %v107 = vsel %vm73, %v68, 0.0
  %108 = vadd.xlane.f32.xlu0 %v107
  %v109 = vpop.xlane.xlu0 %108
  %v110 = vsel %vm73, %v69, 0.0
  %111 = vadd.xlane.f32.xlu0 %v110
  %v112 = vpop.xlane.xlu0 %111
  %v113 = vsel %vm73, %v70, 0.0
  %114 = vadd.xlane.f32.xlu0 %v113
  %v115 = vpop.xlane.xlu0 %114
  %v116 = vsel %vm73, %v71, 0.0
  %117 = vadd.xlane.f32.xlu0 %v116
  %v118 = vpop.xlane.xlu0 %117
  %v119 = vsel %vm73, %v72, 0.0
  %120 = vadd.xlane.f32.xlu0 %v119
  %v121 = vpop.xlane.xlu0 %120
  %v122 = vmul.f32 %v39, %v39
  %v123 = vmul.f32 %v40, %v40
  %v124 = vmul.f32 %v41, %v41
  %v125 = vmul.f32 %v42, %v42
  %v126 = vmul.f32 %v43, %v43
  %v127 = vmul.f32 %v44, %v44
  %v128 = vmul.f32 %v45, %v45
  %v129 = vmul.f32 %v46, %v46
  %v130 = vmul.f32 %v47, %v47
  %v131 = vmul.f32 %v48, %v48
  %v132 = vmul.f32 %v49, %v49
  %v133 = vmul.f32 %v50, %v50
  %v134 = vmul.f32 %v51, %v51
  %v135 = vmul.f32 %v52, %v52
  %v136 = vmul.f32 %v53, %v53
  %v137 = vmul.f32 %v54, %v54
  %vm138 = vcmask 130048
  %v139 = vsel %vm138, %v122, 0.0
  %140 = vadd.xlane.f32.xlu0 %v139
  %v141 = vpop.xlane.xlu0 %140
  %v142 = vsel %vm138, %v123, 0.0
  %143 = vadd.xlane.f32.xlu0 %v142
  %v144 = vpop.xlane.xlu0 %143
  %v145 = vsel %vm138, %v124, 0.0
  %146 = vadd.xlane.f32.xlu0 %v145
  %v147 = vpop.xlane.xlu0 %146
  %v148 = vsel %vm138, %v125, 0.0
  %149 = vadd.xlane.f32.xlu0 %v148
  %v150 = vpop.xlane.xlu0 %149
  %v151 = vsel %vm138, %v126, 0.0
  %152 = vadd.xlane.f32.xlu0 %v151
  %v153 = vpop.xlane.xlu0 %152
  %v154 = vsel %vm138, %v127, 0.0
  %155 = vadd.xlane.f32.xlu0 %v154
  %v156 = vpop.xlane.xlu0 %155
  %v157 = vsel %vm138, %v128, 0.0
  %158 = vadd.xlane.f32.xlu0 %v157
  %v159 = vpop.xlane.xlu0 %158
  %v160 = vsel %vm138, %v129, 0.0
  %161 = vadd.xlane.f32.xlu0 %v160
  %v162 = vpop.xlane.xlu0 %161
  %v163 = vsel %vm138, %v130, 0.0
  %164 = vadd.xlane.f32.xlu0 %v163
  %v165 = vpop.xlane.xlu0 %164
  %v166 = vsel %vm138, %v131, 0.0
  %167 = vadd.xlane.f32.xlu0 %v166
  %v168 = vpop.xlane.xlu0 %167
  %v169 = vsel %vm138, %v132, 0.0
  %170 = vadd.xlane.f32.xlu0 %v169
  %v171 = vpop.xlane.xlu0 %170
  %v172 = vsel %vm138, %v133, 0.0
  %173 = vadd.xlane.f32.xlu0 %v172
  %v174 = vpop.xlane.xlu0 %173
  %v175 = vsel %vm138, %v134, 0.0
  %176 = vadd.xlane.f32.xlu0 %v175
  %v177 = vpop.xlane.xlu0 %176
  %v178 = vsel %vm138, %v135, 0.0
  %179 = vadd.xlane.f32.xlu0 %v178
  %v180 = vpop.xlane.xlu0 %179
  %v181 = vsel %vm138, %v136, 0.0
  %182 = vadd.xlane.f32.xlu0 %v181
  %v183 = vpop.xlane.xlu0 %182
  %v184 = vsel %vm138, %v137, 0.0
  %185 = vadd.xlane.f32.xlu0 %v184
  %v186 = vpop.xlane.xlu0 %185
  %v188 = vlaneseq
  %v189 = vshrl.u32 %v188, 7
  %v190 = vsub.s32 0, %v189
  %v191 = vrot.slane %v55, %v190
  %v193 = vmul.f32 %v23, %v191
  %v194 = vmul.f32 %v24, %v191
  %v195 = vmul.f32 %v25, %v191
  %v196 = vmul.f32 %v26, %v191
  %v197 = vmul.f32 %v27, %v191
  %v198 = vmul.f32 %v28, %v191
  %v199 = vmul.f32 %v29, %v191
  %v200 = vmul.f32 %v30, %v191
  %v201 = vmul.f32 %v31, %v191
  %v202 = vmul.f32 %v32, %v191
  %v203 = vmul.f32 %v33, %v191
  %v204 = vmul.f32 %v34, %v191
  %v205 = vmul.f32 %v35, %v191
  %v206 = vmul.f32 %v36, %v191
  %v207 = vmul.f32 %v37, %v191
  %v208 = vmul.f32 %v38, %v191
  %v209 = vsel %vm73, %v193, 0.0
  %210 = vadd.xlane.f32.xlu0 %v209
  %v211 = vpop.xlane.xlu0 %210
  %v212 = vsel %vm73, %v194, 0.0
  %213 = vadd.xlane.f32.xlu0 %v212
  %v214 = vpop.xlane.xlu0 %213
  %v215 = vsel %vm73, %v195, 0.0
  %216 = vadd.xlane.f32.xlu0 %v215
  %v217 = vpop.xlane.xlu0 %216
  %v218 = vsel %vm73, %v196, 0.0
  %219 = vadd.xlane.f32.xlu0 %v218
  %v220 = vpop.xlane.xlu0 %219
  %v221 = vsel %vm73, %v197, 0.0
  %222 = vadd.xlane.f32.xlu0 %v221
  %v223 = vpop.xlane.xlu0 %222
  %v224 = vsel %vm73, %v198, 0.0
  %225 = vadd.xlane.f32.xlu0 %v224
  %v226 = vpop.xlane.xlu0 %225
  %v227 = vsel %vm73, %v199, 0.0
  %228 = vadd.xlane.f32.xlu0 %v227
  %v229 = vpop.xlane.xlu0 %228
  %v230 = vsel %vm73, %v200, 0.0
  %231 = vadd.xlane.f32.xlu0 %v230
  %v232 = vpop.xlane.xlu0 %231
  %v233 = vsel %vm73, %v201, 0.0
  %234 = vadd.xlane.f32.xlu0 %v233
  %v235 = vpop.xlane.xlu0 %234
  %v236 = vsel %vm73, %v202, 0.0
  %237 = vadd.xlane.f32.xlu0 %v236
  %v238 = vpop.xlane.xlu0 %237
  %v239 = vsel %vm73, %v203, 0.0
  %240 = vadd.xlane.f32.xlu0 %v239
  %v241 = vpop.xlane.xlu0 %240
  %v242 = vsel %vm73, %v204, 0.0
  %243 = vadd.xlane.f32.xlu0 %v242
  %v244 = vpop.xlane.xlu0 %243
  %v245 = vsel %vm73, %v205, 0.0
  %246 = vadd.xlane.f32.xlu0 %v245
  %v247 = vpop.xlane.xlu0 %246
  %v248 = vsel %vm73, %v206, 0.0
  %249 = vadd.xlane.f32.xlu0 %v248
  %v250 = vpop.xlane.xlu0 %249
  %v251 = vsel %vm73, %v207, 0.0
  %252 = vadd.xlane.f32.xlu0 %v251
  %v253 = vpop.xlane.xlu0 %252
  %v254 = vsel %vm73, %v208, 0.0
  %255 = vadd.xlane.f32.xlu0 %v254
  %v256 = vpop.xlane.xlu0 %255
  %v258 = vlaneseq
  %v259 = vshrl.u32 %v258, 7
  %v260 = vsub.s32 0, %v259
  %v261 = vrot.slane %v56, %v260
  %v263 = vmul.f32 %v39, %v261
  %v264 = vmul.f32 %v40, %v261
  %v265 = vmul.f32 %v41, %v261
  %v266 = vmul.f32 %v42, %v261
  %v267 = vmul.f32 %v43, %v261
  %v268 = vmul.f32 %v44, %v261
  %v269 = vmul.f32 %v45, %v261
  %v270 = vmul.f32 %v46, %v261
  %v271 = vmul.f32 %v47, %v261
  %v272 = vmul.f32 %v48, %v261
  %v273 = vmul.f32 %v49, %v261
  %v274 = vmul.f32 %v50, %v261
  %v275 = vmul.f32 %v51, %v261
  %v276 = vmul.f32 %v52, %v261
  %v277 = vmul.f32 %v53, %v261
  %v278 = vmul.f32 %v54, %v261
  %v279 = vsel %vm138, %v263, 0.0
  %280 = vadd.xlane.f32.xlu0 %v279
  %v281 = vpop.xlane.xlu0 %280
  %v282 = vsel %vm138, %v264, 0.0
  %283 = vadd.xlane.f32.xlu0 %v282
  %v284 = vpop.xlane.xlu0 %283
  %v285 = vsel %vm138, %v265, 0.0
  %286 = vadd.xlane.f32.xlu0 %v285
  %v287 = vpop.xlane.xlu0 %286
  %v288 = vsel %vm138, %v266, 0.0
  %289 = vadd.xlane.f32.xlu0 %v288
  %v290 = vpop.xlane.xlu0 %289
  %v291 = vsel %vm138, %v267, 0.0
  %292 = vadd.xlane.f32.xlu0 %v291
  %v293 = vpop.xlane.xlu0 %292
  %v294 = vsel %vm138, %v268, 0.0
  %295 = vadd.xlane.f32.xlu0 %v294
  %v296 = vpop.xlane.xlu0 %295
  %v297 = vsel %vm138, %v269, 0.0
  %298 = vadd.xlane.f32.xlu0 %v297
  %v299 = vpop.xlane.xlu0 %298
  %v300 = vsel %vm138, %v270, 0.0
  %301 = vadd.xlane.f32.xlu0 %v300
  %v302 = vpop.xlane.xlu0 %301
  %v303 = vsel %vm138, %v271, 0.0
  %304 = vadd.xlane.f32.xlu0 %v303
  %v305 = vpop.xlane.xlu0 %304
  %v306 = vsel %vm138, %v272, 0.0
  %307 = vadd.xlane.f32.xlu0 %v306
  %v308 = vpop.xlane.xlu0 %307
  %v309 = vsel %vm138, %v273, 0.0
  %310 = vadd.xlane.f32.xlu0 %v309
  %v311 = vpop.xlane.xlu0 %310
  %v312 = vsel %vm138, %v274, 0.0
  %313 = vadd.xlane.f32.xlu0 %v312
  %v314 = vpop.xlane.xlu0 %313
  %v315 = vsel %vm138, %v275, 0.0
  %316 = vadd.xlane.f32.xlu0 %v315
  %v317 = vpop.xlane.xlu0 %316
  %v318 = vsel %vm138, %v276, 0.0
  %319 = vadd.xlane.f32.xlu0 %v318
  %v320 = vpop.xlane.xlu0 %319
  %v321 = vsel %vm138, %v277, 0.0
  %322 = vadd.xlane.f32.xlu0 %v321
  %v323 = vpop.xlane.xlu0 %322
  %v324 = vsel %vm138, %v278, 0.0
  %325 = vadd.xlane.f32.xlu0 %v324
  %v326 = vpop.xlane.xlu0 %325
  %v327 = vmul.f32 %v55, %v55
  %vm328 = vcmask 253952
  %v329 = vsel %vm328, %v327, 0.0
  %330 = vadd.xlane.f32.xlu0 %v329
  %v331 = vpop.xlane.xlu0 %330
  %v332 = vrot.slane %v331, 4
  %v333 = vadd.f32 %v331, %v332
  %v334 = vrot.slane %v333, 2
  %v335 = vadd.f32 %v333, %v334
  %v336 = vrot.slane %v335, 1
  %v337 = vadd.f32 %v335, %v336
  %s338 = vtos %v337
  %v339 = vmul.f32 %v56, %v56
  %vm340 = vcmask 122880
  %v341 = vsel %vm340, %v339, 0.0
  %342 = vadd.xlane.f32.xlu0 %v341
  %v343 = vpop.xlane.xlu0 %342
  %v344 = vrot.slane %v343, 4
  %v345 = vadd.f32 %v343, %v344
  %v346 = vrot.slane %v345, 2
  %v347 = vadd.f32 %v345, %v346
  %v348 = vrot.slane %v347, 1
  %v349 = vadd.f32 %v347, %v348
  %s350 = vtos %v349
  %v351 = vmul.f32 %v211, 2.0
  %v352 = vmul.f32 %v214, 2.0
  %v353 = vmul.f32 %v217, 2.0
  %v354 = vmul.f32 %v220, 2.0
  %v355 = vmul.f32 %v223, 2.0
  %v356 = vmul.f32 %v226, 2.0
  %v357 = vmul.f32 %v229, 2.0
  %v358 = vmul.f32 %v232, 2.0
  %v359 = vmul.f32 %v235, 2.0
  %v360 = vmul.f32 %v238, 2.0
  %v361 = vmul.f32 %v241, 2.0
  %v362 = vmul.f32 %v244, 2.0
  %v363 = vmul.f32 %v247, 2.0
  %v364 = vmul.f32 %v250, 2.0
  %v365 = vmul.f32 %v253, 2.0
  %v366 = vmul.f32 %v256, 2.0
  %v367 = vsub.f32 %v76, %v351
  %v368 = vsub.f32 %v79, %v352
  %v369 = vsub.f32 %v82, %v353
  %v370 = vsub.f32 %v85, %v354
  %v371 = vsub.f32 %v88, %v355
  %v372 = vsub.f32 %v91, %v356
  %v373 = vsub.f32 %v94, %v357
  %v374 = vsub.f32 %v97, %v358
  %v375 = vsub.f32 %v100, %v359
  %v376 = vsub.f32 %v103, %v360
  %v377 = vsub.f32 %v106, %v361
  %v378 = vsub.f32 %v109, %v362
  %v379 = vsub.f32 %v112, %v363
  %v380 = vsub.f32 %v115, %v364
  %v381 = vsub.f32 %v118, %v365
  %v382 = vsub.f32 %v121, %v366
  %v383 = vstv %s338
  %v384 = vadd.f32 %v367, %v383
  %v385 = vadd.f32 %v368, %v383
  %v386 = vadd.f32 %v369, %v383
  %v387 = vadd.f32 %v370, %v383
  %v388 = vadd.f32 %v371, %v383
  %v389 = vadd.f32 %v372, %v383
  %v390 = vadd.f32 %v373, %v383
  %v391 = vadd.f32 %v374, %v383
  %v392 = vadd.f32 %v375, %v383
  %v393 = vadd.f32 %v376, %v383
  %v394 = vadd.f32 %v377, %v383
  %v395 = vadd.f32 %v378, %v383
  %v396 = vadd.f32 %v379, %v383
  %v397 = vadd.f32 %v380, %v383
  %v398 = vadd.f32 %v381, %v383
  %v399 = vadd.f32 %v382, %v383
  %v400 = vmax.f32 %v384, 0.0
  %v401 = vmax.f32 %v385, 0.0
  %v402 = vmax.f32 %v386, 0.0
  %v403 = vmax.f32 %v387, 0.0
  %v404 = vmax.f32 %v388, 0.0
  %v405 = vmax.f32 %v389, 0.0
  %v406 = vmax.f32 %v390, 0.0
  %v407 = vmax.f32 %v391, 0.0
  %v408 = vmax.f32 %v392, 0.0
  %v409 = vmax.f32 %v393, 0.0
  %v410 = vmax.f32 %v394, 0.0
  %v411 = vmax.f32 %v395, 0.0
  %v412 = vmax.f32 %v396, 0.0
  %v413 = vmax.f32 %v397, 0.0
  %v414 = vmax.f32 %v398, 0.0
  %v415 = vmax.f32 %v399, 0.0
  %v416 = vrsqrt.pop %v400
  %v417 = vmul.f32 %v400, %v416
  %vm418 = vcmp.eq.f32.partialorder %v400, inf
  %v419 = vsel %vm418, %v400, %v417
  %vm420 = vcmp.eq.f32.partialorder %v400, 0.0
  %v421 = vand.u32 %v400, 2147483648
  %v422 = vsel %vm420, %v421, %v419
  %v423 = vrsqrt.pop %v401
  %v424 = vmul.f32 %v401, %v423
  %vm425 = vcmp.eq.f32.partialorder %v401, inf
  %v426 = vsel %vm425, %v401, %v424
  %vm427 = vcmp.eq.f32.partialorder %v401, 0.0
  %v428 = vand.u32 %v401, 2147483648
  %v429 = vsel %vm427, %v428, %v426
  %v430 = vrsqrt.pop %v402
  %v431 = vmul.f32 %v402, %v430
  %vm432 = vcmp.eq.f32.partialorder %v402, inf
  %v433 = vsel %vm432, %v402, %v431
  %vm434 = vcmp.eq.f32.partialorder %v402, 0.0
  %v435 = vand.u32 %v402, 2147483648
  %v436 = vsel %vm434, %v435, %v433
  %v437 = vrsqrt.pop %v403
  %v438 = vmul.f32 %v403, %v437
  %vm439 = vcmp.eq.f32.partialorder %v403, inf
  %v440 = vsel %vm439, %v403, %v438
  %vm441 = vcmp.eq.f32.partialorder %v403, 0.0
  %v442 = vand.u32 %v403, 2147483648
  %v443 = vsel %vm441, %v442, %v440
  %v444 = vrsqrt.pop %v404
  %v445 = vmul.f32 %v404, %v444
  %vm446 = vcmp.eq.f32.partialorder %v404, inf
  %v447 = vsel %vm446, %v404, %v445
  %vm448 = vcmp.eq.f32.partialorder %v404, 0.0
  %v449 = vand.u32 %v404, 2147483648
  %v450 = vsel %vm448, %v449, %v447
  %v451 = vrsqrt.pop %v405
  %v452 = vmul.f32 %v405, %v451
  %vm453 = vcmp.eq.f32.partialorder %v405, inf
  %v454 = vsel %vm453, %v405, %v452
  %vm455 = vcmp.eq.f32.partialorder %v405, 0.0
  %v456 = vand.u32 %v405, 2147483648
  %v457 = vsel %vm455, %v456, %v454
  %v458 = vrsqrt.pop %v406
  %v459 = vmul.f32 %v406, %v458
  %vm460 = vcmp.eq.f32.partialorder %v406, inf
  %v461 = vsel %vm460, %v406, %v459
  %vm462 = vcmp.eq.f32.partialorder %v406, 0.0
  %v463 = vand.u32 %v406, 2147483648
  %v464 = vsel %vm462, %v463, %v461
  %v465 = vrsqrt.pop %v407
  %v466 = vmul.f32 %v407, %v465
  %vm467 = vcmp.eq.f32.partialorder %v407, inf
  %v468 = vsel %vm467, %v407, %v466
  %vm469 = vcmp.eq.f32.partialorder %v407, 0.0
  %v470 = vand.u32 %v407, 2147483648
  %v471 = vsel %vm469, %v470, %v468
  %v472 = vrsqrt.pop %v408
  %v473 = vmul.f32 %v408, %v472
  %vm474 = vcmp.eq.f32.partialorder %v408, inf
  %v475 = vsel %vm474, %v408, %v473
  %vm476 = vcmp.eq.f32.partialorder %v408, 0.0
  %v477 = vand.u32 %v408, 2147483648
  %v478 = vsel %vm476, %v477, %v475
  %v479 = vrsqrt.pop %v409
  %v480 = vmul.f32 %v409, %v479
  %vm481 = vcmp.eq.f32.partialorder %v409, inf
  %v482 = vsel %vm481, %v409, %v480
  %vm483 = vcmp.eq.f32.partialorder %v409, 0.0
  %v484 = vand.u32 %v409, 2147483648
  %v485 = vsel %vm483, %v484, %v482
  %v486 = vrsqrt.pop %v410
  %v487 = vmul.f32 %v410, %v486
  %vm488 = vcmp.eq.f32.partialorder %v410, inf
  %v489 = vsel %vm488, %v410, %v487
  %vm490 = vcmp.eq.f32.partialorder %v410, 0.0
  %v491 = vand.u32 %v410, 2147483648
  %v492 = vsel %vm490, %v491, %v489
  %v493 = vrsqrt.pop %v411
  %v494 = vmul.f32 %v411, %v493
  %vm495 = vcmp.eq.f32.partialorder %v411, inf
  %v496 = vsel %vm495, %v411, %v494
  %vm497 = vcmp.eq.f32.partialorder %v411, 0.0
  %v498 = vand.u32 %v411, 2147483648
  %v499 = vsel %vm497, %v498, %v496
  %v500 = vrsqrt.pop %v412
  %v501 = vmul.f32 %v412, %v500
  %vm502 = vcmp.eq.f32.partialorder %v412, inf
  %v503 = vsel %vm502, %v412, %v501
  %vm504 = vcmp.eq.f32.partialorder %v412, 0.0
  %v505 = vand.u32 %v412, 2147483648
  %v506 = vsel %vm504, %v505, %v503
  %v507 = vrsqrt.pop %v413
  %v508 = vmul.f32 %v413, %v507
  %vm509 = vcmp.eq.f32.partialorder %v413, inf
  %v510 = vsel %vm509, %v413, %v508
  %vm511 = vcmp.eq.f32.partialorder %v413, 0.0
  %v512 = vand.u32 %v413, 2147483648
  %v513 = vsel %vm511, %v512, %v510
  %v514 = vrsqrt.pop %v414
  %v515 = vmul.f32 %v414, %v514
  %vm516 = vcmp.eq.f32.partialorder %v414, inf
  %v517 = vsel %vm516, %v414, %v515
  %vm518 = vcmp.eq.f32.partialorder %v414, 0.0
  %v519 = vand.u32 %v414, 2147483648
  %v520 = vsel %vm518, %v519, %v517
  %v521 = vrsqrt.pop %v415
  %v522 = vmul.f32 %v415, %v521
  %vm523 = vcmp.eq.f32.partialorder %v415, inf
  %v524 = vsel %vm523, %v415, %v522
  %vm525 = vcmp.eq.f32.partialorder %v415, 0.0
  %v526 = vand.u32 %v415, 2147483648
  %v527 = vsel %vm525, %v526, %v524
  %vm528 = vcmask 7168
  %529 = vst.msk [vmem:[%s8] sm:$0xff] %vm528, %v422
  %530 = vst.msk [vmem:[%s8 + $0x8] sm:$0xff] %vm528, %v429
  %531 = vst.msk [vmem:[%s8 + $0x10] sm:$0xff] %vm528, %v436
  %532 = vst.msk [vmem:[%s8 + $0x18] sm:$0xff] %vm528, %v443
  %533 = vst.msk [vmem:[%s8 + $0x20] sm:$0xff] %vm528, %v450
  %534 = vst.msk [vmem:[%s8 + $0x28] sm:$0xff] %vm528, %v457
  %535 = vst.msk [vmem:[%s8 + $0x30] sm:$0xff] %vm528, %v464
  %536 = vst.msk [vmem:[%s8 + $0x38] sm:$0xff] %vm528, %v471
  %537 = vst.msk [vmem:[%s8 + $0x40] sm:$0xff] %vm528, %v478
  %538 = vst.msk [vmem:[%s8 + $0x48] sm:$0xff] %vm528, %v485
  %539 = vst.msk [vmem:[%s8 + $0x50] sm:$0xff] %vm528, %v492
  %540 = vst.msk [vmem:[%s8 + $0x58] sm:$0xff] %vm528, %v499
  %541 = vst.msk [vmem:[%s8 + $0x60] sm:$0xff] %vm528, %v506
  %542 = vst.msk [vmem:[%s8 + $0x68] sm:$0xff] %vm528, %v513
  %543 = vst.msk [vmem:[%s8 + $0x70] sm:$0xff] %vm528, %v520
  %544 = vst.msk [vmem:[%s8 + $0x78] sm:$0xff] %vm528, %v527
  %v545 = vmul.f32 %v281, 2.0
  %v546 = vmul.f32 %v284, 2.0
  %v547 = vmul.f32 %v287, 2.0
  %v548 = vmul.f32 %v290, 2.0
  %v549 = vmul.f32 %v293, 2.0
  %v550 = vmul.f32 %v296, 2.0
  %v551 = vmul.f32 %v299, 2.0
  %v552 = vmul.f32 %v302, 2.0
  %v553 = vmul.f32 %v305, 2.0
  %v554 = vmul.f32 %v308, 2.0
  %v555 = vmul.f32 %v311, 2.0
  %v556 = vmul.f32 %v314, 2.0
  %v557 = vmul.f32 %v317, 2.0
  %v558 = vmul.f32 %v320, 2.0
  %v559 = vmul.f32 %v323, 2.0
  %v560 = vmul.f32 %v326, 2.0
  %v561 = vsub.f32 %v141, %v545
  %v562 = vsub.f32 %v144, %v546
  %v563 = vsub.f32 %v147, %v547
  %v564 = vsub.f32 %v150, %v548
  %v565 = vsub.f32 %v153, %v549
  %v566 = vsub.f32 %v156, %v550
  %v567 = vsub.f32 %v159, %v551
  %v568 = vsub.f32 %v162, %v552
  %v569 = vsub.f32 %v165, %v553
  %v570 = vsub.f32 %v168, %v554
  %v571 = vsub.f32 %v171, %v555
  %v572 = vsub.f32 %v174, %v556
  %v573 = vsub.f32 %v177, %v557
  %v574 = vsub.f32 %v180, %v558
  %v575 = vsub.f32 %v183, %v559
  %v576 = vsub.f32 %v186, %v560
  %v577 = vstv %s350
  %v578 = vadd.f32 %v561, %v577
  %v579 = vadd.f32 %v562, %v577
  %v580 = vadd.f32 %v563, %v577
  %v581 = vadd.f32 %v564, %v577
  %v582 = vadd.f32 %v565, %v577
  %v583 = vadd.f32 %v566, %v577
  %v584 = vadd.f32 %v567, %v577
  %v585 = vadd.f32 %v568, %v577
  %v586 = vadd.f32 %v569, %v577
  %v587 = vadd.f32 %v570, %v577
  %v588 = vadd.f32 %v571, %v577
  %v589 = vadd.f32 %v572, %v577
  %v590 = vadd.f32 %v573, %v577
  %v591 = vadd.f32 %v574, %v577
  %v592 = vadd.f32 %v575, %v577
  %v593 = vadd.f32 %v576, %v577
  %v594 = vmax.f32 %v578, 0.0
  %v595 = vmax.f32 %v579, 0.0
  %v596 = vmax.f32 %v580, 0.0
  %v597 = vmax.f32 %v581, 0.0
  %v598 = vmax.f32 %v582, 0.0
  %v599 = vmax.f32 %v583, 0.0
  %v600 = vmax.f32 %v584, 0.0
  %v601 = vmax.f32 %v585, 0.0
  %v602 = vmax.f32 %v586, 0.0
  %v603 = vmax.f32 %v587, 0.0
  %v604 = vmax.f32 %v588, 0.0
  %v605 = vmax.f32 %v589, 0.0
  %v606 = vmax.f32 %v590, 0.0
  %v607 = vmax.f32 %v591, 0.0
  %v608 = vmax.f32 %v592, 0.0
  %v609 = vmax.f32 %v593, 0.0
  %v610 = vrsqrt.pop %v594
  %v611 = vmul.f32 %v594, %v610
  %vm612 = vcmp.eq.f32.partialorder %v594, inf
  %v613 = vsel %vm612, %v594, %v611
  %vm614 = vcmp.eq.f32.partialorder %v594, 0.0
  %v615 = vand.u32 %v594, 2147483648
  %v616 = vsel %vm614, %v615, %v613
  %v617 = vrsqrt.pop %v595
  %v618 = vmul.f32 %v595, %v617
  %vm619 = vcmp.eq.f32.partialorder %v595, inf
  %v620 = vsel %vm619, %v595, %v618
  %vm621 = vcmp.eq.f32.partialorder %v595, 0.0
  %v622 = vand.u32 %v595, 2147483648
  %v623 = vsel %vm621, %v622, %v620
  %v624 = vrsqrt.pop %v596
  %v625 = vmul.f32 %v596, %v624
  %vm626 = vcmp.eq.f32.partialorder %v596, inf
  %v627 = vsel %vm626, %v596, %v625
  %vm628 = vcmp.eq.f32.partialorder %v596, 0.0
  %v629 = vand.u32 %v596, 2147483648
  %v630 = vsel %vm628, %v629, %v627
  %v631 = vrsqrt.pop %v597
  %v632 = vmul.f32 %v597, %v631
  %vm633 = vcmp.eq.f32.partialorder %v597, inf
  %v634 = vsel %vm633, %v597, %v632
  %vm635 = vcmp.eq.f32.partialorder %v597, 0.0
  %v636 = vand.u32 %v597, 2147483648
  %v637 = vsel %vm635, %v636, %v634
  %v638 = vrsqrt.pop %v598
  %v639 = vmul.f32 %v598, %v638
  %vm640 = vcmp.eq.f32.partialorder %v598, inf
  %v641 = vsel %vm640, %v598, %v639
  %vm642 = vcmp.eq.f32.partialorder %v598, 0.0
  %v643 = vand.u32 %v598, 2147483648
  %v644 = vsel %vm642, %v643, %v641
  %v645 = vrsqrt.pop %v599
  %v646 = vmul.f32 %v599, %v645
  %vm647 = vcmp.eq.f32.partialorder %v599, inf
  %v648 = vsel %vm647, %v599, %v646
  %vm649 = vcmp.eq.f32.partialorder %v599, 0.0
  %v650 = vand.u32 %v599, 2147483648
  %v651 = vsel %vm649, %v650, %v648
  %v652 = vrsqrt.pop %v600
  %v653 = vmul.f32 %v600, %v652
  %vm654 = vcmp.eq.f32.partialorder %v600, inf
  %v655 = vsel %vm654, %v600, %v653
  %vm656 = vcmp.eq.f32.partialorder %v600, 0.0
  %v657 = vand.u32 %v600, 2147483648
  %v658 = vsel %vm656, %v657, %v655
  %v659 = vrsqrt.pop %v601
  %v660 = vmul.f32 %v601, %v659
  %vm661 = vcmp.eq.f32.partialorder %v601, inf
  %v662 = vsel %vm661, %v601, %v660
  %vm663 = vcmp.eq.f32.partialorder %v601, 0.0
  %v664 = vand.u32 %v601, 2147483648
  %v665 = vsel %vm663, %v664, %v662
  %v666 = vrsqrt.pop %v602
  %v667 = vmul.f32 %v602, %v666
  %vm668 = vcmp.eq.f32.partialorder %v602, inf
  %v669 = vsel %vm668, %v602, %v667
  %vm670 = vcmp.eq.f32.partialorder %v602, 0.0
  %v671 = vand.u32 %v602, 2147483648
  %v672 = vsel %vm670, %v671, %v669
  %v673 = vrsqrt.pop %v603
  %v674 = vmul.f32 %v603, %v673
  %vm675 = vcmp.eq.f32.partialorder %v603, inf
  %v676 = vsel %vm675, %v603, %v674
  %vm677 = vcmp.eq.f32.partialorder %v603, 0.0
  %v678 = vand.u32 %v603, 2147483648
  %v679 = vsel %vm677, %v678, %v676
  %v680 = vrsqrt.pop %v604
  %v681 = vmul.f32 %v604, %v680
  %vm682 = vcmp.eq.f32.partialorder %v604, inf
  %v683 = vsel %vm682, %v604, %v681
  %vm684 = vcmp.eq.f32.partialorder %v604, 0.0
  %v685 = vand.u32 %v604, 2147483648
  %v686 = vsel %vm684, %v685, %v683
  %v687 = vrsqrt.pop %v605
  %v688 = vmul.f32 %v605, %v687
  %vm689 = vcmp.eq.f32.partialorder %v605, inf
  %v690 = vsel %vm689, %v605, %v688
  %vm691 = vcmp.eq.f32.partialorder %v605, 0.0
  %v692 = vand.u32 %v605, 2147483648
  %v693 = vsel %vm691, %v692, %v690
  %v694 = vrsqrt.pop %v606
  %v695 = vmul.f32 %v606, %v694
  %vm696 = vcmp.eq.f32.partialorder %v606, inf
  %v697 = vsel %vm696, %v606, %v695
  %vm698 = vcmp.eq.f32.partialorder %v606, 0.0
  %v699 = vand.u32 %v606, 2147483648
  %v700 = vsel %vm698, %v699, %v697
  %v701 = vrsqrt.pop %v607
  %v702 = vmul.f32 %v607, %v701
  %vm703 = vcmp.eq.f32.partialorder %v607, inf
  %v704 = vsel %vm703, %v607, %v702
  %vm705 = vcmp.eq.f32.partialorder %v607, 0.0
  %v706 = vand.u32 %v607, 2147483648
  %v707 = vsel %vm705, %v706, %v704
  %v708 = vrsqrt.pop %v608
  %v709 = vmul.f32 %v608, %v708
  %vm710 = vcmp.eq.f32.partialorder %v608, inf
  %v711 = vsel %vm710, %v608, %v709
  %vm712 = vcmp.eq.f32.partialorder %v608, 0.0
  %v713 = vand.u32 %v608, 2147483648
  %v714 = vsel %vm712, %v713, %v711
  %v715 = vrsqrt.pop %v609
  %v716 = vmul.f32 %v609, %v715
  %vm717 = vcmp.eq.f32.partialorder %v609, inf
  %v718 = vsel %vm717, %v609, %v716
  %vm719 = vcmp.eq.f32.partialorder %v609, 0.0
  %v720 = vand.u32 %v609, 2147483648
  %v721 = vsel %vm719, %v720, %v718
  %722 = vst.msk [vmem:[%s9] sm:$0xff] %vm528, %v616
  %723 = vst.msk [vmem:[%s9 + $0x8] sm:$0xff] %vm528, %v623
  %724 = vst.msk [vmem:[%s9 + $0x10] sm:$0xff] %vm528, %v630
  %725 = vst.msk [vmem:[%s9 + $0x18] sm:$0xff] %vm528, %v637
  %726 = vst.msk [vmem:[%s9 + $0x20] sm:$0xff] %vm528, %v644
  %727 = vst.msk [vmem:[%s9 + $0x28] sm:$0xff] %vm528, %v651
  %728 = vst.msk [vmem:[%s9 + $0x30] sm:$0xff] %vm528, %v658
  %729 = vst.msk [vmem:[%s9 + $0x38] sm:$0xff] %vm528, %v665
  %730 = vst.msk [vmem:[%s9 + $0x40] sm:$0xff] %vm528, %v672
  %731 = vst.msk [vmem:[%s9 + $0x48] sm:$0xff] %vm528, %v679
  %732 = vst.msk [vmem:[%s9 + $0x50] sm:$0xff] %vm528, %v686
  %733 = vst.msk [vmem:[%s9 + $0x58] sm:$0xff] %vm528, %v693
  %734 = vst.msk [vmem:[%s9 + $0x60] sm:$0xff] %vm528, %v700
  %735 = vst.msk [vmem:[%s9 + $0x68] sm:$0xff] %vm528, %v707
  %736 = vst.msk [vmem:[%s9 + $0x70] sm:$0xff] %vm528, %v714
  %737 = vst.msk [vmem:[%s9 + $0x78] sm:$0xff] %vm528, %v721
  %738 = vst.msk [vmem:[%s4] sm:$0xff] %vm73, %v23
  %739 = vst.msk [vmem:[%s4 + $0x8] sm:$0xff] %vm73, %v24
  %740 = vst.msk [vmem:[%s4 + $0x10] sm:$0xff] %vm73, %v25
  %741 = vst.msk [vmem:[%s4 + $0x18] sm:$0xff] %vm73, %v26
  %742 = vst.msk [vmem:[%s4 + $0x20] sm:$0xff] %vm73, %v27
  %743 = vst.msk [vmem:[%s4 + $0x28] sm:$0xff] %vm73, %v28
  %744 = vst.msk [vmem:[%s4 + $0x30] sm:$0xff] %vm73, %v29
  %745 = vst.msk [vmem:[%s4 + $0x38] sm:$0xff] %vm73, %v30
  %746 = vst.msk [vmem:[%s4 + $0x40] sm:$0xff] %vm73, %v31
  %747 = vst.msk [vmem:[%s4 + $0x48] sm:$0xff] %vm73, %v32
  %748 = vst.msk [vmem:[%s4 + $0x50] sm:$0xff] %vm73, %v33
  %749 = vst.msk [vmem:[%s4 + $0x58] sm:$0xff] %vm73, %v34
  %750 = vst.msk [vmem:[%s4 + $0x60] sm:$0xff] %vm73, %v35
  %751 = vst.msk [vmem:[%s4 + $0x68] sm:$0xff] %vm73, %v36
  %752 = vst.msk [vmem:[%s4 + $0x70] sm:$0xff] %vm73, %v37
  %753 = vst.msk [vmem:[%s4 + $0x78] sm:$0xff] %vm73, %v38
  %vm754 = vcmask 269568
  %755 = vst.msk [vmem:[%s4] sm:$0xff] %vm754, %v76
  %756 = vst.msk [vmem:[%s4 + $0x8] sm:$0xff] %vm754, %v79
  %757 = vst.msk [vmem:[%s4 + $0x10] sm:$0xff] %vm754, %v82
  %758 = vst.msk [vmem:[%s4 + $0x18] sm:$0xff] %vm754, %v85
  %759 = vst.msk [vmem:[%s4 + $0x20] sm:$0xff] %vm754, %v88
  %760 = vst.msk [vmem:[%s4 + $0x28] sm:$0xff] %vm754, %v91
  %761 = vst.msk [vmem:[%s4 + $0x30] sm:$0xff] %vm754, %v94
  %762 = vst.msk [vmem:[%s4 + $0x38] sm:$0xff] %vm754, %v97
  %763 = vst.msk [vmem:[%s4 + $0x40] sm:$0xff] %vm754, %v100
  %764 = vst.msk [vmem:[%s4 + $0x48] sm:$0xff] %vm754, %v103
  %765 = vst.msk [vmem:[%s4 + $0x50] sm:$0xff] %vm754, %v106
  %766 = vst.msk [vmem:[%s4 + $0x58] sm:$0xff] %vm754, %v109
  %767 = vst.msk [vmem:[%s4 + $0x60] sm:$0xff] %vm754, %v112
  %768 = vst.msk [vmem:[%s4 + $0x68] sm:$0xff] %vm754, %v115
  %769 = vst.msk [vmem:[%s4 + $0x70] sm:$0xff] %vm754, %v118
  %770 = vst.msk [vmem:[%s4 + $0x78] sm:$0xff] %vm754, %v121
  %vm771 = vcmask 277768
  %772 = vst.msk [vmem:[%s4] sm:$0xff] %vm771, 1.0
  %773 = vst.msk [vmem:[%s4 + $0x8] sm:$0xff] %vm771, 1.0
  %774 = vst.msk [vmem:[%s4 + $0x10] sm:$0xff] %vm771, 1.0
  %775 = vst.msk [vmem:[%s4 + $0x18] sm:$0xff] %vm771, 1.0
  %776 = vst.msk [vmem:[%s4 + $0x20] sm:$0xff] %vm771, 1.0
  %777 = vst.msk [vmem:[%s4 + $0x28] sm:$0xff] %vm771, 1.0
  %778 = vst.msk [vmem:[%s4 + $0x30] sm:$0xff] %vm771, 1.0
  %779 = vst.msk [vmem:[%s4 + $0x38] sm:$0xff] %vm771, 1.0
  %780 = vst.msk [vmem:[%s4 + $0x40] sm:$0xff] %vm771, 1.0
  %781 = vst.msk [vmem:[%s4 + $0x48] sm:$0xff] %vm771, 1.0
  %782 = vst.msk [vmem:[%s4 + $0x50] sm:$0xff] %vm771, 1.0
  %783 = vst.msk [vmem:[%s4 + $0x58] sm:$0xff] %vm771, 1.0
  %784 = vst.msk [vmem:[%s4 + $0x60] sm:$0xff] %vm771, 1.0
  %785 = vst.msk [vmem:[%s4 + $0x68] sm:$0xff] %vm771, 1.0
  %786 = vst.msk [vmem:[%s4 + $0x70] sm:$0xff] %vm771, 1.0
  %787 = vst.msk [vmem:[%s4 + $0x78] sm:$0xff] %vm771, 1.0
  %v788 = vmul.f32 %v23, -2.0
  %v789 = vmul.f32 %v24, -2.0
  %v790 = vmul.f32 %v25, -2.0
  %v791 = vmul.f32 %v26, -2.0
  %v792 = vmul.f32 %v27, -2.0
  %v793 = vmul.f32 %v28, -2.0
  %v794 = vmul.f32 %v29, -2.0
  %v795 = vmul.f32 %v30, -2.0
  %v796 = vmul.f32 %v31, -2.0
  %v797 = vmul.f32 %v32, -2.0
  %v798 = vmul.f32 %v33, -2.0
  %v799 = vmul.f32 %v34, -2.0
  %v800 = vmul.f32 %v35, -2.0
  %v801 = vmul.f32 %v36, -2.0
  %v802 = vmul.f32 %v37, -2.0
  %v803 = vmul.f32 %v38, -2.0
  %804 = vst.msk [vmem:[%s5] sm:$0xff] %vm73, %v788
  %805 = vst.msk [vmem:[%s5 + $0x8] sm:$0xff] %vm73, %v789
  %806 = vst.msk [vmem:[%s5 + $0x10] sm:$0xff] %vm73, %v790
  %807 = vst.msk [vmem:[%s5 + $0x18] sm:$0xff] %vm73, %v791
  %808 = vst.msk [vmem:[%s5 + $0x20] sm:$0xff] %vm73, %v792
  %809 = vst.msk [vmem:[%s5 + $0x28] sm:$0xff] %vm73, %v793
  %810 = vst.msk [vmem:[%s5 + $0x30] sm:$0xff] %vm73, %v794
  %811 = vst.msk [vmem:[%s5 + $0x38] sm:$0xff] %vm73, %v795
  %812 = vst.msk [vmem:[%s5 + $0x40] sm:$0xff] %vm73, %v796
  %813 = vst.msk [vmem:[%s5 + $0x48] sm:$0xff] %vm73, %v797
  %814 = vst.msk [vmem:[%s5 + $0x50] sm:$0xff] %vm73, %v798
  %815 = vst.msk [vmem:[%s5 + $0x58] sm:$0xff] %vm73, %v799
  %816 = vst.msk [vmem:[%s5 + $0x60] sm:$0xff] %vm73, %v800
  %817 = vst.msk [vmem:[%s5 + $0x68] sm:$0xff] %vm73, %v801
  %818 = vst.msk [vmem:[%s5 + $0x70] sm:$0xff] %vm73, %v802
  %819 = vst.msk [vmem:[%s5 + $0x78] sm:$0xff] %vm73, %v803
  %820 = vst.msk [vmem:[%s5] sm:$0xff] %vm754, 1.0
  %821 = vst.msk [vmem:[%s5 + $0x8] sm:$0xff] %vm754, 1.0
  %822 = vst.msk [vmem:[%s5 + $0x10] sm:$0xff] %vm754, 1.0
  %823 = vst.msk [vmem:[%s5 + $0x18] sm:$0xff] %vm754, 1.0
  %824 = vst.msk [vmem:[%s5 + $0x20] sm:$0xff] %vm754, 1.0
  %825 = vst.msk [vmem:[%s5 + $0x28] sm:$0xff] %vm754, 1.0
  %826 = vst.msk [vmem:[%s5 + $0x30] sm:$0xff] %vm754, 1.0
  %827 = vst.msk [vmem:[%s5 + $0x38] sm:$0xff] %vm754, 1.0
  %828 = vst.msk [vmem:[%s5 + $0x40] sm:$0xff] %vm754, 1.0
  %829 = vst.msk [vmem:[%s5 + $0x48] sm:$0xff] %vm754, 1.0
  %830 = vst.msk [vmem:[%s5 + $0x50] sm:$0xff] %vm754, 1.0
  %831 = vst.msk [vmem:[%s5 + $0x58] sm:$0xff] %vm754, 1.0
  %832 = vst.msk [vmem:[%s5 + $0x60] sm:$0xff] %vm754, 1.0
  %833 = vst.msk [vmem:[%s5 + $0x68] sm:$0xff] %vm754, 1.0
  %834 = vst.msk [vmem:[%s5 + $0x70] sm:$0xff] %vm754, 1.0
  %835 = vst.msk [vmem:[%s5 + $0x78] sm:$0xff] %vm754, 1.0
  %836 = vst.msk [vmem:[%s5] sm:$0xff] %vm771, %v76
  %837 = vst.msk [vmem:[%s5 + $0x8] sm:$0xff] %vm771, %v79
  %838 = vst.msk [vmem:[%s5 + $0x10] sm:$0xff] %vm771, %v82
  %839 = vst.msk [vmem:[%s5 + $0x18] sm:$0xff] %vm771, %v85
  %840 = vst.msk [vmem:[%s5 + $0x20] sm:$0xff] %vm771, %v88
  %841 = vst.msk [vmem:[%s5 + $0x28] sm:$0xff] %vm771, %v91
  %842 = vst.msk [vmem:[%s5 + $0x30] sm:$0xff] %vm771, %v94
  %843 = vst.msk [vmem:[%s5 + $0x38] sm:$0xff] %vm771, %v97
  %844 = vst.msk [vmem:[%s5 + $0x40] sm:$0xff] %vm771, %v100
  %845 = vst.msk [vmem:[%s5 + $0x48] sm:$0xff] %vm771, %v103
  %846 = vst.msk [vmem:[%s5 + $0x50] sm:$0xff] %vm771, %v106
  %847 = vst.msk [vmem:[%s5 + $0x58] sm:$0xff] %vm771, %v109
  %848 = vst.msk [vmem:[%s5 + $0x60] sm:$0xff] %vm771, %v112
  %849 = vst.msk [vmem:[%s5 + $0x68] sm:$0xff] %vm771, %v115
  %850 = vst.msk [vmem:[%s5 + $0x70] sm:$0xff] %vm771, %v118
  %851 = vst.msk [vmem:[%s5 + $0x78] sm:$0xff] %vm771, %v121
  %852 = vst.msk [vmem:[%s6] sm:$0xff] %vm138, %v39
  %853 = vst.msk [vmem:[%s6 + $0x8] sm:$0xff] %vm138, %v40
  %854 = vst.msk [vmem:[%s6 + $0x10] sm:$0xff] %vm138, %v41
  %855 = vst.msk [vmem:[%s6 + $0x18] sm:$0xff] %vm138, %v42
  %856 = vst.msk [vmem:[%s6 + $0x20] sm:$0xff] %vm138, %v43
  %857 = vst.msk [vmem:[%s6 + $0x28] sm:$0xff] %vm138, %v44
  %858 = vst.msk [vmem:[%s6 + $0x30] sm:$0xff] %vm138, %v45
  %859 = vst.msk [vmem:[%s6 + $0x38] sm:$0xff] %vm138, %v46
  %860 = vst.msk [vmem:[%s6 + $0x40] sm:$0xff] %vm138, %v47
  %861 = vst.msk [vmem:[%s6 + $0x48] sm:$0xff] %vm138, %v48
  %862 = vst.msk [vmem:[%s6 + $0x50] sm:$0xff] %vm138, %v49
  %863 = vst.msk [vmem:[%s6 + $0x58] sm:$0xff] %vm138, %v50
  %864 = vst.msk [vmem:[%s6 + $0x60] sm:$0xff] %vm138, %v51
  %865 = vst.msk [vmem:[%s6 + $0x68] sm:$0xff] %vm138, %v52
  %866 = vst.msk [vmem:[%s6 + $0x70] sm:$0xff] %vm138, %v53
  %867 = vst.msk [vmem:[%s6 + $0x78] sm:$0xff] %vm138, %v54
  %vm868 = vcmask 138368
  %869 = vst.msk [vmem:[%s6] sm:$0xff] %vm868, %v141
  %870 = vst.msk [vmem:[%s6 + $0x8] sm:$0xff] %vm868, %v144
  %871 = vst.msk [vmem:[%s6 + $0x10] sm:$0xff] %vm868, %v147
  %872 = vst.msk [vmem:[%s6 + $0x18] sm:$0xff] %vm868, %v150
  %873 = vst.msk [vmem:[%s6 + $0x20] sm:$0xff] %vm868, %v153
  %874 = vst.msk [vmem:[%s6 + $0x28] sm:$0xff] %vm868, %v156
  %875 = vst.msk [vmem:[%s6 + $0x30] sm:$0xff] %vm868, %v159
  %876 = vst.msk [vmem:[%s6 + $0x38] sm:$0xff] %vm868, %v162
  %877 = vst.msk [vmem:[%s6 + $0x40] sm:$0xff] %vm868, %v165
  %878 = vst.msk [vmem:[%s6 + $0x48] sm:$0xff] %vm868, %v168
  %879 = vst.msk [vmem:[%s6 + $0x50] sm:$0xff] %vm868, %v171
  %880 = vst.msk [vmem:[%s6 + $0x58] sm:$0xff] %vm868, %v174
  %881 = vst.msk [vmem:[%s6 + $0x60] sm:$0xff] %vm868, %v177
  %882 = vst.msk [vmem:[%s6 + $0x68] sm:$0xff] %vm868, %v180
  %883 = vst.msk [vmem:[%s6 + $0x70] sm:$0xff] %vm868, %v183
  %884 = vst.msk [vmem:[%s6 + $0x78] sm:$0xff] %vm868, %v186
  %vm885 = vcmask 146568
  %886 = vst.msk [vmem:[%s6] sm:$0xff] %vm885, 1.0
  %887 = vst.msk [vmem:[%s6 + $0x8] sm:$0xff] %vm885, 1.0
  %888 = vst.msk [vmem:[%s6 + $0x10] sm:$0xff] %vm885, 1.0
  %889 = vst.msk [vmem:[%s6 + $0x18] sm:$0xff] %vm885, 1.0
  %890 = vst.msk [vmem:[%s6 + $0x20] sm:$0xff] %vm885, 1.0
  %891 = vst.msk [vmem:[%s6 + $0x28] sm:$0xff] %vm885, 1.0
  %892 = vst.msk [vmem:[%s6 + $0x30] sm:$0xff] %vm885, 1.0
  %893 = vst.msk [vmem:[%s6 + $0x38] sm:$0xff] %vm885, 1.0
  %894 = vst.msk [vmem:[%s6 + $0x40] sm:$0xff] %vm885, 1.0
  %895 = vst.msk [vmem:[%s6 + $0x48] sm:$0xff] %vm885, 1.0
  %896 = vst.msk [vmem:[%s6 + $0x50] sm:$0xff] %vm885, 1.0
  %897 = vst.msk [vmem:[%s6 + $0x58] sm:$0xff] %vm885, 1.0
  %898 = vst.msk [vmem:[%s6 + $0x60] sm:$0xff] %vm885, 1.0
  %899 = vst.msk [vmem:[%s6 + $0x68] sm:$0xff] %vm885, 1.0
  %900 = vst.msk [vmem:[%s6 + $0x70] sm:$0xff] %vm885, 1.0
  %901 = vst.msk [vmem:[%s6 + $0x78] sm:$0xff] %vm885, 1.0
  %v902 = vmul.f32 %v39, -2.0
  %v903 = vmul.f32 %v40, -2.0
  %v904 = vmul.f32 %v41, -2.0
  %v905 = vmul.f32 %v42, -2.0
  %v906 = vmul.f32 %v43, -2.0
  %v907 = vmul.f32 %v44, -2.0
  %v908 = vmul.f32 %v45, -2.0
  %v909 = vmul.f32 %v46, -2.0
  %v910 = vmul.f32 %v47, -2.0
  %v911 = vmul.f32 %v48, -2.0
  %v912 = vmul.f32 %v49, -2.0
  %v913 = vmul.f32 %v50, -2.0
  %v914 = vmul.f32 %v51, -2.0
  %v915 = vmul.f32 %v52, -2.0
  %v916 = vmul.f32 %v53, -2.0
  %v917 = vmul.f32 %v54, -2.0
  %918 = vst.msk [vmem:[%s7] sm:$0xff] %vm138, %v902
  %919 = vst.msk [vmem:[%s7 + $0x8] sm:$0xff] %vm138, %v903
  %920 = vst.msk [vmem:[%s7 + $0x10] sm:$0xff] %vm138, %v904
  %921 = vst.msk [vmem:[%s7 + $0x18] sm:$0xff] %vm138, %v905
  %922 = vst.msk [vmem:[%s7 + $0x20] sm:$0xff] %vm138, %v906
  %923 = vst.msk [vmem:[%s7 + $0x28] sm:$0xff] %vm138, %v907
  %924 = vst.msk [vmem:[%s7 + $0x30] sm:$0xff] %vm138, %v908
  %925 = vst.msk [vmem:[%s7 + $0x38] sm:$0xff] %vm138, %v909
  %926 = vst.msk [vmem:[%s7 + $0x40] sm:$0xff] %vm138, %v910
  %927 = vst.msk [vmem:[%s7 + $0x48] sm:$0xff] %vm138, %v911
  %928 = vst.msk [vmem:[%s7 + $0x50] sm:$0xff] %vm138, %v912
  %929 = vst.msk [vmem:[%s7 + $0x58] sm:$0xff] %vm138, %v913
  %930 = vst.msk [vmem:[%s7 + $0x60] sm:$0xff] %vm138, %v914
  %931 = vst.msk [vmem:[%s7 + $0x68] sm:$0xff] %vm138, %v915
  %932 = vst.msk [vmem:[%s7 + $0x70] sm:$0xff] %vm138, %v916
  %933 = vst.msk [vmem:[%s7 + $0x78] sm:$0xff] %vm138, %v917
  %934 = vst.msk [vmem:[%s7] sm:$0xff] %vm868, 1.0
  %935 = vst.msk [vmem:[%s7 + $0x8] sm:$0xff] %vm868, 1.0
  %936 = vst.msk [vmem:[%s7 + $0x10] sm:$0xff] %vm868, 1.0
  %937 = vst.msk [vmem:[%s7 + $0x18] sm:$0xff] %vm868, 1.0
  %938 = vst.msk [vmem:[%s7 + $0x20] sm:$0xff] %vm868, 1.0
  %939 = vst.msk [vmem:[%s7 + $0x28] sm:$0xff] %vm868, 1.0
  %940 = vst.msk [vmem:[%s7 + $0x30] sm:$0xff] %vm868, 1.0
  %941 = vst.msk [vmem:[%s7 + $0x38] sm:$0xff] %vm868, 1.0
  %942 = vst.msk [vmem:[%s7 + $0x40] sm:$0xff] %vm868, 1.0
  %943 = vst.msk [vmem:[%s7 + $0x48] sm:$0xff] %vm868, 1.0
  %944 = vst.msk [vmem:[%s7 + $0x50] sm:$0xff] %vm868, 1.0
  %945 = vst.msk [vmem:[%s7 + $0x58] sm:$0xff] %vm868, 1.0
  %946 = vst.msk [vmem:[%s7 + $0x60] sm:$0xff] %vm868, 1.0
  %947 = vst.msk [vmem:[%s7 + $0x68] sm:$0xff] %vm868, 1.0
  %948 = vst.msk [vmem:[%s7 + $0x70] sm:$0xff] %vm868, 1.0
  %949 = vst.msk [vmem:[%s7 + $0x78] sm:$0xff] %vm868, 1.0
  %950 = vst.msk [vmem:[%s7] sm:$0xff] %vm885, %v141
  %951 = vst.msk [vmem:[%s7 + $0x8] sm:$0xff] %vm885, %v144
  %952 = vst.msk [vmem:[%s7 + $0x10] sm:$0xff] %vm885, %v147
  %953 = vst.msk [vmem:[%s7 + $0x18] sm:$0xff] %vm885, %v150
  %954 = vst.msk [vmem:[%s7 + $0x20] sm:$0xff] %vm885, %v153
  %955 = vst.msk [vmem:[%s7 + $0x28] sm:$0xff] %vm885, %v156
  %956 = vst.msk [vmem:[%s7 + $0x30] sm:$0xff] %vm885, %v159
  %957 = vst.msk [vmem:[%s7 + $0x38] sm:$0xff] %vm885, %v162
  %958 = vst.msk [vmem:[%s7 + $0x40] sm:$0xff] %vm885, %v165
  %959 = vst.msk [vmem:[%s7 + $0x48] sm:$0xff] %vm885, %v168
  %960 = vst.msk [vmem:[%s7 + $0x50] sm:$0xff] %vm885, %v171
  %961 = vst.msk [vmem:[%s7 + $0x58] sm:$0xff] %vm885, %v174
  %962 = vst.msk [vmem:[%s7 + $0x60] sm:$0xff] %vm885, %v177
  %963 = vst.msk [vmem:[%s7 + $0x68] sm:$0xff] %vm885, %v180
  %964 = vst.msk [vmem:[%s7 + $0x70] sm:$0xff] %vm885, %v183
  %965 = vst.msk [vmem:[%s7 + $0x78] sm:$0xff] %vm885, %v186
  // Predicated region
  $region18: #{nsa_loss_adapted.2} parent=0 // pred_check
    _
  $region19: #{nsa_loss_adapted.2} parent=0 // pred_check_branch
    %967 = sbr.rel (0) target = $region21
  $region20: #{nsa_loss_adapted.2} parent=0 // pred_region
    _
  $region21: #{nsa_loss_adapted.2} parent=0 // pred_fallthru
    _
  // Predicated region
  $region22: #{nsa_loss_adapted.2} parent=0 // pred_check
    _
  $region23: #{nsa_loss_adapted.2} parent=0 // pred_check_branch
    %969 = sbr.rel (0) target = $region25
  $region24: #{nsa_loss_adapted.2} parent=0 // pred_region
    _
  $region25: #{nsa_loss_adapted.2} parent=0 // pred_fallthru
    _
  // Predicated region
  $region26: #{nsa_loss_adapted.2} parent=0 // pred_check
    _
  $region27: #{nsa_loss_adapted.2} parent=0 // pred_check_branch
    %971 = sbr.rel (0) target = $region29
  $region28: #{nsa_loss_adapted.2} parent=0 // pred_region
    _
  $region29: #{nsa_loss_adapted.2} parent=0 // pred_fallthru
    _
  // Predicated region
  $region30: #{nsa_loss_adapted.2} parent=0 // pred_check
    _
  $region31: #{nsa_loss_adapted.2} parent=0 // pred_check_branch
    %973 = sbr.rel (0) target = $region33
  $region32: #{nsa_loss_adapted.2} parent=0 // pred_region
    _
  $region33: #{nsa_loss_adapted.2} parent=0 // pred_fallthru
    _
  // Predicated region
  $region34: #{nsa_loss_adapted.2} parent=0 // pred_check
    _
  $region35: #{nsa_loss_adapted.2} parent=0 // pred_check_branch
    %975 = sbr.rel (0) target = $region37
  $region36: #{nsa_loss_adapted.2} parent=0 // pred_region
    _
  $region37: #{nsa_loss_adapted.2} parent=0 // pred_fallthru
    _
  // Predicated region
  $region38: #{nsa_loss_adapted.2} parent=0 // pred_check
    _
  $region39: #{nsa_loss_adapted.2} parent=0 // pred_check_branch
    %977 = sbr.rel (0) target = $region41
  $region40: #{nsa_loss_adapted.2} parent=0 // pred_region
    _
  $region41: #{nsa_loss_adapted.2} parent=0 // pred_fallthru
    _
  // Predicated region
  $region42: #{nsa_loss_adapted.2} parent=0 // pred_check
    _
  $region43: #{nsa_loss_adapted.2} parent=0 // pred_check_branch
    %979 = sbr.rel (0) target = $region45
  $region44: #{nsa_loss_adapted.2} parent=0 // pred_region
    _
  $region45: #{nsa_loss_adapted.2} parent=0 // pred_fallthru
    _
  // Predicated region
  $region46: #{nsa_loss_adapted.2} parent=0 // pred_check
    _
  $region47: #{nsa_loss_adapted.2} parent=0 // pred_check_branch
    %981 = sbr.rel (0) target = $region49
  $region48: #{nsa_loss_adapted.2} parent=0 // pred_region
    _
  $region49: #{nsa_loss_adapted.2} parent=0 // pred_fallthru
    _
  // Predicated region
  $region50: #{nsa_loss_adapted.2} parent=0 // pred_check
    _
  $region51: #{nsa_loss_adapted.2} parent=0 // pred_check_branch
    %983 = sbr.rel (0) target = $region53
  $region52: #{nsa_loss_adapted.2} parent=0 // pred_region
    _
  $region53: #{nsa_loss_adapted.2} parent=0 // pred_fallthru
    _
  // Predicated region
  $region54: #{nsa_loss_adapted.2} parent=0 // pred_check
    _
  $region55: #{nsa_loss_adapted.2} parent=0 // pred_check_branch
    %985 = sbr.rel (0) target = $region57
  $region56: #{nsa_loss_adapted.2} parent=0 // pred_region
    _
  $region57: #{nsa_loss_adapted.2} parent=0 // pred_fallthru
    _
  // Predicated region
  $region58: #{nsa_loss_adapted.2} parent=0 // pred_check
    _
  $region59: #{nsa_loss_adapted.2} parent=0 // pred_check_branch
    %987 = sbr.rel (0) target = $region61
  $region60: #{nsa_loss_adapted.2} parent=0 // pred_region
    _
  $region61: #{nsa_loss_adapted.2} parent=0 // pred_fallthru
    _
  // Predicated region
  $region62: #{nsa_loss_adapted.2} parent=0 // pred_check
    _
  $region63: #{nsa_loss_adapted.2} parent=0 // pred_check_branch
    %989 = sbr.rel (0) target = $region65
  $region64: #{nsa_loss_adapted.2} parent=0 // pred_region
    _
  $region65: #{nsa_loss_adapted.2} parent=0 // pred_fallthru
    _

</llo_original>
